<compile_context>
chip_gen: v5e
topology: v5e:2x2
jax: 0.10.0
libtpu: 0.0.40
codegen_flags: <defaults>
</compile_context>

<pallas_src>
import functools
import math

import jax
import jax.numpy as jnp
from jax.experimental import pallas as pl
from jax.experimental.pallas import tpu as pltpu

LANE = 128
_NEG_INF = -1e30


# --------------------------------------------------------------------------
# Small helpers.
# --------------------------------------------------------------------------
def _round_up(v, m):
    return ((v + m - 1) // m) * m


def _round_up_lane(v):
    return _round_up(v, LANE)


def _pad2(a, rows, cols, fill=0.0):
    r, c = a.shape
    return jnp.pad(a, ((0, rows - r), (0, cols - c)), constant_values=fill)


def _pad1(a, n, fill=0.0):
    return jnp.pad(a, (0, n - a.shape[0]), constant_values=fill)


def _vmem_cap_bytes():
    """Chip-aware VMEM capacity (falls back to the v7x 64 MiB floor)."""
    try:
        return int(pltpu.get_tpu_info().vmem_capacity_bytes)
    except Exception:
        return 64 * 1024 * 1024


def _vmem_limit(block_bytes):
    """Explicit scoped-VMEM budget: double-buffered tiles + headroom, capped at
    ~70% of the physical per-core VMEM so the compiler keeps internal scratch."""
    budget = int(0.70 * _vmem_cap_bytes())
    want = 2 * int(block_bytes) + 2 * 1024 * 1024
    return int(min(max(want, 4 * 1024 * 1024), budget))


# --------------------------------------------------------------------------
# Fully fused kernel: streamed base conv + RoI pool accumulation over an HW
# grid, with the FC / IoU / adjacency / GCN / cls+bbox head on the last step.
# --------------------------------------------------------------------------
def _fused_kernel(x_ref, px_ref, py_ref, boxes_ref, bt_ref,
                  wbt_ref, bb0_ref,
                  wh_ref, bh_ref, w1_ref, b1_ref, w2_ref, b2_ref,
                  wc_ref, bc_ref, wb_ref, bvb_ref,
                  cls_ref, bbox_ref,
                  pooled_acc,
                  *, norm, iou_thr, dis_thr, child_size):
    step = pl.program_id(0)
    last = pl.num_programs(0) - 1

    @pl.when(step == 0)
    def _():
        pooled_acc[...] = jnp.zeros_like(pooled_acc)

    boxes = boxes_ref[...]                                   # (N, 4)
    x1, y1 = boxes[:, 0:1], boxes[:, 1:2]
    x2, y2 = boxes[:, 2:3], boxes[:, 3:4]

    # ---- streamed RCNN_base: synthetic 1x1 conv + ReLU, transposed layout ---
    # TODO(synk): full VGG/ResNet backbone not reproduced (single 1x1 conv).
    x_bf = x_ref[...].astype(jnp.bfloat16)                   # (CIN, T)
    base_t = jnp.dot(wbt_ref[...], x_bf,
                     preferred_element_type=jnp.float32)     # (Cpad, T)
    base_t = jnp.maximum(base_t + bb0_ref[...], 0.0).astype(jnp.bfloat16)

    # ---- RoI membership mask for this pixel tile -> pooled accumulation ----
    # TODO(synk): approximates RoIAlignAvg(7x7)+flatten with a per-ROI box mean.
    px = px_ref[...]                                          # (1, T)
    py = py_ref[...]                                          # (1, T)
    in_box = ((px >= x1) & (px <= x2) &
              (py >= y1) & (py <= y2)).astype(jnp.bfloat16)   # (N, T)
    pooled_acc[...] += jax.lax.dot_general(
        in_box, base_t, (((1,), (1,)), ((), ())),
        preferred_element_type=jnp.float32)                   # (N, Cpad) f32

    @pl.when(step == last)
    def _():
        n = boxes.shape[0]

        # Analytic per-box pixel count (pixels sit at integer coordinates);
        # 1/cnt applied AFTER the matmul, in f32.
        nx = jnp.maximum(jnp.floor(x2) - jnp.ceil(x1) + 1.0, 0.0)
        ny = jnp.maximum(jnp.floor(y2) - jnp.ceil(y1) + 1.0, 0.0)
        cnt = jnp.maximum(nx * ny, 1.0)
        pooled = pooled_acc[...] * pl.reciprocal(cnt, approx=True)

        # ---- _head_to_tail: fc + relu --------------------------------------
        feat = jnp.dot(pooled.astype(jnp.bfloat16), wh_ref[...],
                       preferred_element_type=jnp.float32) + bh_ref[...]
        feat = jnp.maximum(feat, 0.0)

        # ---- bbox_overlaps_batch / bbox_distances_batch ---------------------
        bt = bt_ref[...]                                      # (4, N)
        x1t, y1t, x2t, y2t = bt[0:1, :], bt[1:2, :], bt[2:3, :], bt[3:4, :]
        area = (x2 - x1 + 1.0) * (y2 - y1 + 1.0)
        area_t = (x2t - x1t + 1.0) * (y2t - y1t + 1.0)
        iw = jnp.maximum(jnp.minimum(x2, x2t) - jnp.maximum(x1, x1t) + 1.0, 0.0)
        ih = jnp.maximum(jnp.minimum(y2, y2t) - jnp.maximum(y1, y1t) + 1.0, 0.0)
        inter = iw * ih
        iou = inter * pl.reciprocal(area + area_t - inter, approx=True)
        cx, cy = 0.5 * (x1 + x2), 0.5 * (y1 + y2)
        cxt, cyt = 0.5 * (x1t + x2t), 0.5 * (y1t + y2t)
        dxb, dyb = cx - cxt, cy - cyt
        dist = jnp.sqrt(dxb * dxb + dyb * dyb) * (1.0 / norm)

        # ---- adjacency mask: identity + first-k eligible neighbours per row -
        # TODO(synk): original samples neighbours with torch.randperm;
        # deterministic first-k selection here.
        eligible = ((iou >= iou_thr) | (dist < dis_thr)).astype(jnp.bfloat16)
        row = jax.lax.broadcasted_iota(jnp.int32, (n, n), 0)
        col = jax.lax.broadcasted_iota(jnp.int32, (n, n), 1)
        tri = (row <= col).astype(jnp.bfloat16)               # prefix-sum matrix
        csum = jnp.dot(eligible, tri, preferred_element_type=jnp.float32)
        selected = jnp.where((eligible > 0.0) & (csum <= child_size), 1.0, 0.0)
        mask = jnp.maximum((row == col).astype(jnp.float32), selected)

        # ---- cosine-similarity adjacency (row pre-normalised Gram matrix) ---
        inv_len = pl.reciprocal(
            jnp.sqrt(jnp.sum(feat * feat, axis=1, keepdims=True)) + 1e-8,
            approx=True)
        xn = (feat * inv_len).astype(jnp.bfloat16)
        sim = jax.lax.dot_general(xn, xn, (((1,), (1,)), ((), ())),
                                  preferred_element_type=jnp.float32)
        adj = (mask * sim).astype(jnp.bfloat16)

        # ---- two GCN layers: relu(adj @ (h @ W) + b) -------------------------
        def gcn(h_f32, w_r, b_r):
            support = jnp.dot(h_f32.astype(jnp.bfloat16), w_r[...],
                              preferred_element_type=jnp.float32)
            out = jnp.dot(adj, support.astype(jnp.bfloat16),
                          preferred_element_type=jnp.float32) + b_r[...]
            return jnp.maximum(out, 0.0)

        h1 = gcn(feat, w1_ref, b1_ref)
        h2 = gcn(h1, w2_ref, b2_ref)
        hb = h2.astype(jnp.bfloat16)

        # ---- cls / bbox heads + softmax (padded cls cols carry -1e30 bias) --
        cls_score = (jnp.dot(hb, wc_ref[...], preferred_element_type=jnp.float32)
                     + bc_ref[...])
        mrow = jnp.max(cls_score, axis=1, keepdims=True)
        e = jnp.exp(cls_score - mrow)
        cls_ref[...] = e / jnp.sum(e, axis=1, keepdims=True)
        bbox_ref[...] = (jnp.dot(hb, wb_ref[...], preferred_element_type=jnp.float32)
                         + bvb_ref[...])


# --------------------------------------------------------------------------
# One-time parameter preparation (hoisted out of the per-forward path).
# --------------------------------------------------------------------------
def prepare_params(params, h, w):
    cin, c_base = params['w_base'].shape
    d_hid = params['w_gcn1'].shape[0]
    n_classes = params['w_cls'].shape[1]

    c_pad = _round_up_lane(c_base)
    d_pad = _round_up_lane(d_hid)
    out_pad = _round_up_lane(max(n_classes, 4 * n_classes))

    hw = h * w
    tile = min(512, _round_up_lane(hw))
    hw_pad = _round_up(hw, tile)

    # Pixel coordinate rows for the in-kernel RoI membership test.  Padded
    # pixels get a large-negative sentinel so they never fall inside a box.
    pi = jnp.arange(hw_pad, dtype=jnp.int32)
    valid = pi < hw
    px = jnp.where(valid, (pi % w).astype(jnp.float32), -1e9).reshape(1, hw_pad)
    py = jnp.where(valid, (pi // w).astype(jnp.float32), -1e9).reshape(1, hw_pad)

    prep = dict(
        # transposed base weight: (Cpad, CIN) so the streamed conv contracts K
        # normally with the (CIN, HW) image layout (no wrapper transpose).
        w_base_t=_pad2(params['w_base'], cin, c_pad).T.astype(jnp.bfloat16),
        b_base=_pad1(params['b_base'], c_pad).reshape(c_pad, 1).astype(jnp.float32),
        w_head=_pad2(params['w_head'], c_pad, d_pad).astype(jnp.bfloat16),
        b_head=_pad1(params['b_head'], d_pad).reshape(1, d_pad).astype(jnp.float32),
        w_gcn1=_pad2(params['w_gcn1'], d_pad, d_pad).astype(jnp.bfloat16),
        b_gcn1=_pad1(params['b_gcn1'], d_pad).reshape(1, d_pad).astype(jnp.float32),
        w_gcn2=_pad2(params['w_gcn2'], d_pad, d_pad).astype(jnp.bfloat16),
        b_gcn2=_pad1(params['b_gcn2'], d_pad).reshape(1, d_pad).astype(jnp.float32),
        w_cls=_pad2(params['w_cls'], d_pad, out_pad).astype(jnp.bfloat16),
        b_cls=_pad1(params['b_cls'], out_pad, fill=_NEG_INF)
            .reshape(1, out_pad).astype(jnp.float32),
        w_bbox=_pad2(params['w_bbox'], d_pad, out_pad).astype(jnp.bfloat16),
        b_bbox=_pad1(params['b_bbox'], out_pad).reshape(1, out_pad).astype(jnp.float32),
        px=px, py=py,
    )
    cfg = dict(n_classes=n_classes, c_pad=c_pad, d_pad=d_pad, out_pad=out_pad,
               tile=tile, hw_pad=hw_pad, cin=cin)
    return prep, cfg


# --------------------------------------------------------------------------
# Forward pass (inference; self.training == False).
# --------------------------------------------------------------------------
def faster_rcnn_forward(im_data_nchw, rois, prep, cfg):
    bsz, cin, h, w = im_data_nchw.shape
    assert bsz == 1          # GCN branch uses batch index 0 / torch.mm (2-D)
    assert cin == cfg['cin']

    tile, hw_pad = cfg['tile'], cfg['hw_pad']
    c_pad, out_pad = cfg['c_pad'], cfg['out_pad']
    hw = h * w

    # (1, C, H, W) -> (C, H*W): pure metadata reshape (no wrapper transpose).
    x = im_data_nchw.reshape(cin, hw)
    if hw_pad != hw:
        x = jnp.pad(x, ((0, 0), (0, hw_pad - hw)))

    rois_flat = rois.reshape(-1, 5)
    boxes = rois_flat[:, 1:5].astype(jnp.float32)
    n = boxes.shape[0]

    kernel = functools.partial(
        _fused_kernel,
        norm=float(math.sqrt(h * h + w * w)),
        iou_thr=0.7, dis_thr=0.01, child_size=4.0)

    def full(shape):
        nd = len(shape)
        return pl.BlockSpec(shape, lambda i, _nd=nd: (0,) * _nd)

    args = (x, prep['px'], prep['py'], boxes, boxes.T,
            prep['w_base_t'], prep['b_base'],
            prep['w_head'], prep['b_head'],
            prep['w_gcn1'], prep['b_gcn1'],
            prep['w_gcn2'], prep['b_gcn2'],
            prep['w_cls'], prep['b_cls'],
            prep['w_bbox'], prep['b_bbox'])

    in_specs = [pl.BlockSpec((cin, tile), lambda i: (0, i)),     # image tile
                pl.BlockSpec((1, tile), lambda i: (0, i)),       # px tile
                pl.BlockSpec((1, tile), lambda i: (0, i))]       # py tile
    in_specs += [full(a.shape) for a in args[3:]]

    param_bytes = sum(int(a.size) * a.dtype.itemsize for a in args[3:])
    tile_bytes = (cin * tile * 4 + 2 * tile * 4          # x + px + py tiles
                  + param_bytes
                  + 2 * n * out_pad * 4                  # resident outputs
                  + n * c_pad * 4                        # pooled accumulator
                  + c_pad * tile * 6)                    # base_t f32 + bf16 temps

    n_tiles = hw_pad // tile
    cls_pad, bbox_pad = pl.pallas_call(
        kernel,
        grid=(n_tiles,),
        in_specs=in_specs,
        out_specs=(pl.BlockSpec((n, out_pad), lambda i: (0, 0)),
                   pl.BlockSpec((n, out_pad), lambda i: (0, 0))),
        out_shape=(jax.ShapeDtypeStruct((n, out_pad), jnp.float32),
                   jax.ShapeDtypeStruct((n, out_pad), jnp.float32)),
        scratch_shapes=[pltpu.VMEM((n, c_pad), jnp.float32)],
        compiler_params=pltpu.CompilerParams(
            dimension_semantics=("arbitrary",),          # sequential HW reduction
            vmem_limit_bytes=_vmem_limit(tile_bytes)),
    )(*args)

    n_classes = cfg['n_classes']
    n_rois = rois.shape[1]
    cls_prob = cls_pad[:, :n_classes].reshape(bsz, n_rois, n_classes)
    bbox_pred = bbox_pad[:, :4 * n_classes].reshape(bsz, n_rois, 4 * n_classes)

    # Inference returns (losses are 0, rois_label is None).
    # TODO(synk): RPN (anchors + NMS) and _ProposalTargetLayer are not
    # reproduced; rois are taken as given proposals.
    return rois, cls_prob, bbox_pred, 0.0, 0.0, 0.0, 0.0, None


if __name__ == "__main__":
    key = jax.random.PRNGKey(0)
    keys = jax.random.split(key, 12)

    B, CIN, H, W = 1, 3, 32, 32          # im_data (NCHW, small synthetic image)
    C_BASE = 16                          # dout_base_model (small)
    D_HID = 32                           # _head_to_tail / GCN hidden size
    N_CLASSES = 5                        # len(classes)
    R = 16                               # number of proposals (num_proposal)

    im_data = jax.random.normal(keys[0], (B, CIN, H, W), dtype=jnp.float32)

    # Synthetic proposals.
    x1 = jax.random.uniform(keys[1], (R,), minval=0.0, maxval=20.0)
    y1 = jax.random.uniform(keys[2], (R,), minval=0.0, maxval=20.0)
    bw = jax.random.uniform(keys[3], (R,), minval=4.0, maxval=11.0)
    bh = jax.random.uniform(keys[4], (R,), minval=4.0, maxval=11.0)
    x2 = jnp.minimum(x1 + bw, W - 1.0)
    y2 = jnp.minimum(y1 + bh, H - 1.0)
    rois = jnp.stack([jnp.zeros((R,), jnp.float32), x1, y1, x2, y2],
                     axis=1).reshape(B, R, 5)

    # Deterministic parameter init (mirrors normal_init: zero bias, small std).
    params = dict(
        w_base=0.1 * jax.random.normal(keys[5], (CIN, C_BASE), jnp.float32),
        b_base=jnp.zeros((C_BASE,), jnp.float32),
        w_head=0.1 * jax.random.normal(keys[6], (C_BASE, D_HID), jnp.float32),
        b_head=jnp.zeros((D_HID,), jnp.float32),
        w_gcn1=0.1 * jax.random.normal(keys[7], (D_HID, D_HID), jnp.float32),
        b_gcn1=jnp.zeros((D_HID,), jnp.float32),
        w_gcn2=0.1 * jax.random.normal(keys[8], (D_HID, D_HID), jnp.float32),
        b_gcn2=jnp.zeros((D_HID,), jnp.float32),
        w_cls=0.01 * jax.random.normal(keys[9], (D_HID, N_CLASSES), jnp.float32),
        b_cls=jnp.zeros((N_CLASSES,), jnp.float32),
        w_bbox=0.001 * jax.random.normal(keys[10], (D_HID, 4 * N_CLASSES), jnp.float32),
        b_bbox=jnp.zeros((4 * N_CLASSES,), jnp.float32),
    )

    # One-time parameter prep (padding / bf16 casts / pixel tables hoisted).
    prep, cfg = prepare_params(params, H, W)

    rois_out, cls_prob, bbox_pred, *_ = faster_rcnn_forward(im_data, rois, prep, cfg)
    jax.block_until_ready(cls_prob)
    jax.block_until_ready(bbox_pred)

    assert rois_out.shape == (B, R, 5)
    assert cls_prob.shape == (B, R, N_CLASSES)
    assert bbox_pred.shape == (B, R, 4 * N_CLASSES)
    assert bool(jnp.all(jnp.isfinite(cls_prob))) and bool(jnp.all(jnp.isfinite(bbox_pred)))
    # Padded cls columns must not leak into the softmax (rows sum to ~1).
    assert bool(jnp.all(jnp.abs(jnp.sum(cls_prob, axis=-1) - 1.0) < 5e-3))
    print("KERNEL_OK")
</pallas_src>

<mosaic_0001>
module attributes {stable_mosaic.version = 11 : i64} {
  func.func @_fused_kernel(%arg0: i32, %arg1: memref<3x512xf32, #tpu.memory_space<vmem>>, %arg2: memref<1x512xf32, #tpu.memory_space<vmem>>, %arg3: memref<1x512xf32, #tpu.memory_space<vmem>>, %arg4: memref<16x4xf32, #tpu.memory_space<vmem>>, %arg5: memref<4x16xf32, #tpu.memory_space<vmem>>, %arg6: memref<128x3xbf16, #tpu.memory_space<vmem>>, %arg7: memref<128x1xf32, #tpu.memory_space<vmem>>, %arg8: memref<128x128xbf16, #tpu.memory_space<vmem>>, %arg9: memref<1x128xf32, #tpu.memory_space<vmem>>, %arg10: memref<128x128xbf16, #tpu.memory_space<vmem>>, %arg11: memref<1x128xf32, #tpu.memory_space<vmem>>, %arg12: memref<128x128xbf16, #tpu.memory_space<vmem>>, %arg13: memref<1x128xf32, #tpu.memory_space<vmem>>, %arg14: memref<128x128xbf16, #tpu.memory_space<vmem>>, %arg15: memref<1x128xf32, #tpu.memory_space<vmem>>, %arg16: memref<128x128xbf16, #tpu.memory_space<vmem>>, %arg17: memref<1x128xf32, #tpu.memory_space<vmem>>, %arg18: memref<16x128xf32, #tpu.memory_space<vmem>>, %arg19: memref<16x128xf32, #tpu.memory_space<vmem>>, %arg20: memref<16x128xf32, #tpu.memory_space<vmem>>) attributes {dimension_semantics = [#tpu.dimension_semantics<arbitrary>], iteration_bounds = array<i64: 2>, scalar_prefetch = 0 : i64, scratch_operands = 1 : i64, tpu.core_type = #tpu.core_type<tc>, window_params = [{transform_indices = @transform_0, window_bounds = array<i64: 3, 512>}, {transform_indices = @transform_1, window_bounds = array<i64: 1, 512>}, {transform_indices = @transform_2, window_bounds = array<i64: 1, 512>}, {pipeline_mode = #tpu.pipeline_mode<synchronous>, transform_indices = @transform_3, window_bounds = array<i64: 16, 4>}, {pipeline_mode = #tpu.pipeline_mode<synchronous>, transform_indices = @transform_4, window_bounds = array<i64: 4, 16>}, {pipeline_mode = #tpu.pipeline_mode<synchronous>, transform_indices = @transform_5, window_bounds = array<i64: 128, 3>}, {pipeline_mode = #tpu.pipeline_mode<synchronous>, transform_indices = @transform_6, window_bounds = array<i64: 128, 1>}, {pipeline_mode = #tpu.pipeline_mode<synchronous>, transform_indices = @transform_7, window_bounds = array<i64: 128, 128>}, {pipeline_mode = #tpu.pipeline_mode<synchronous>, transform_indices = @transform_8, window_bounds = array<i64: 1, 128>}, {pipeline_mode = #tpu.pipeline_mode<synchronous>, transform_indices = @transform_9, window_bounds = array<i64: 128, 128>}, {pipeline_mode = #tpu.pipeline_mode<synchronous>, transform_indices = @transform_10, window_bounds = array<i64: 1, 128>}, {pipeline_mode = #tpu.pipeline_mode<synchronous>, transform_indices = @transform_11, window_bounds = array<i64: 128, 128>}, {pipeline_mode = #tpu.pipeline_mode<synchronous>, transform_indices = @transform_12, window_bounds = array<i64: 1, 128>}, {pipeline_mode = #tpu.pipeline_mode<synchronous>, transform_indices = @transform_13, window_bounds = array<i64: 128, 128>}, {pipeline_mode = #tpu.pipeline_mode<synchronous>, transform_indices = @transform_14, window_bounds = array<i64: 1, 128>}, {pipeline_mode = #tpu.pipeline_mode<synchronous>, transform_indices = @transform_15, window_bounds = array<i64: 128, 128>}, {pipeline_mode = #tpu.pipeline_mode<synchronous>, transform_indices = @transform_16, window_bounds = array<i64: 1, 128>}, {pipeline_mode = #tpu.pipeline_mode<synchronous>, transform_indices = @transform_17, window_bounds = array<i64: 16, 128>}, {pipeline_mode = #tpu.pipeline_mode<synchronous>, transform_indices = @transform_18, window_bounds = array<i64: 16, 128>}]} {
    %c0_i32 = arith.constant 0 : i32
    %0 = arith.cmpi eq, %arg0, %c0_i32 : i32
    %1 = arith.extui %0 : i1 to i32
    %c0_i32_0 = arith.constant 0 : i32
    %2 = arith.cmpi ne, %1, %c0_i32_0 : i32
    scf.if %2 {
      %cst_19 = arith.constant 0.000000e+00 : f32
      %45 = vector.broadcast %cst_19 : f32 to vector<16x128xf32>
      %c0_20 = arith.constant 0 : index
      %c0_21 = arith.constant 0 : index
      %46 = vector.load %arg20[%c0_20, %c0_21] : memref<16x128xf32, #tpu.memory_space<vmem>>, vector<16x128xf32>
      tpu.vector_store %arg20[%c0_20, %c0_21], %45 {strides = array<i32>} : memref<16x128xf32, #tpu.memory_space<vmem>>, vector<16x128xf32>,
    } else {
    }
    %c0 = arith.constant 0 : index
    %c0_1 = arith.constant 0 : index
    %3 = vector.load %arg4[%c0, %c0_1] : memref<16x4xf32, #tpu.memory_space<vmem>>, vector<16x4xf32>
    %4 = vector.extract_strided_slice %3 {offsets = [0, 0], sizes = [16, 1], strides = [1, 1]} : vector<16x4xf32> to vector<16x1xf32>
    %5 = vector.extract_strided_slice %3 {offsets = [0, 1], sizes = [16, 1], strides = [1, 1]} : vector<16x4xf32> to vector<16x1xf32>
    %6 = vector.extract_strided_slice %3 {offsets = [0, 2], sizes = [16, 1], strides = [1, 1]} : vector<16x4xf32> to vector<16x1xf32>
    %7 = vector.extract_strided_slice %3 {offsets = [0, 3], sizes = [16, 1], strides = [1, 1]} : vector<16x4xf32> to vector<16x1xf32>
    %c0_2 = arith.constant 0 : index
    %c0_3 = arith.constant 0 : index
    %8 = vector.load %arg1[%c0_2, %c0_3] : memref<3x512xf32, #tpu.memory_space<vmem>>, vector<3x512xf32>
    %9 = arith.truncf %8 : vector<3x512xf32> to vector<3x512xbf16>
    %c0_4 = arith.constant 0 : index
    %c0_5 = arith.constant 0 : index
    %10 = vector.load %arg6[%c0_4, %c0_5] : memref<128x3xbf16, #tpu.memory_space<vmem>>, vector<128x3xbf16>
    %cst = arith.constant dense<0.000000e+00> : vector<128x512xf32>
    %11 = tpu.matmul %10, %9, %cst {dimension_numbers = #tpu.dot_dimension_numbers<[1], [0], [0], [1], [0, 0, 1, 1], [], []>} : vector<128x3xbf16>, vector<3x512xbf16>, vector<128x512xf32> -> vector<128x512xf32>
    %c0_6 = arith.constant 0 : index
    %c0_7 = arith.constant 0 : index
    %12 = vector.load %arg7[%c0_6, %c0_7] : memref<128x1xf32, #tpu.memory_space<vmem>>, vector<128x1xf32>
    %13 = vector.broadcast %12 : vector<128x1xf32> to vector<128x512xf32>
    %14 = arith.addf %11, %13 : vector<128x512xf32>
    %cst_8 = arith.constant 0.000000e+00 : f32
    %15 = vector.broadcast %cst_8 : f32 to vector<128x512xf32>
    %16 = arith.maximumf %14, %15 : vector<128x512xf32>
    %17 = arith.truncf %16 : vector<128x512xf32> to vector<128x512xbf16>
    %c0_9 = arith.constant 0 : index
    %c0_10 = arith.constant 0 : index
    %18 = vector.load %arg2[%c0_9, %c0_10] : memref<1x512xf32, #tpu.memory_space<vmem>>, vector<1x512xf32>
    %c0_11 = arith.constant 0 : index
    %c0_12 = arith.constant 0 : index
    %19 = vector.load %arg3[%c0_11, %c0_12] : memref<1x512xf32, #tpu.memory_space<vmem>>, vector<1x512xf32>
    %20 = vector.broadcast %18 : vector<1x512xf32> to vector<16x512xf32>
    %21 = vector.broadcast %4 : vector<16x1xf32> to vector<16x512xf32>
    %22 = arith.cmpf oge, %20, %21 : vector<16x512xf32>
    %23 = vector.broadcast %18 : vector<1x512xf32> to vector<16x512xf32>
    %24 = vector.broadcast %6 : vector<16x1xf32> to vector<16x512xf32>
    %25 = arith.cmpf ole, %23, %24 : vector<16x512xf32>
    %26 = arith.andi %22, %25 : vector<16x512xi1>
    %27 = vector.broadcast %19 : vector<1x512xf32> to vector<16x512xf32>
    %28 = vector.broadcast %5 : vector<16x1xf32> to vector<16x512xf32>
    %29 = arith.cmpf oge, %27, %28 : vector<16x512xf32>
    %30 = arith.andi %26, %29 : vector<16x512xi1>
    %31 = vector.broadcast %19 : vector<1x512xf32> to vector<16x512xf32>
    %32 = vector.broadcast %7 : vector<16x1xf32> to vector<16x512xf32>
    %33 = arith.cmpf ole, %31, %32 : vector<16x512xf32>
    %34 = arith.andi %30, %33 : vector<16x512xi1>
    %35 = arith.extui %34 : vector<16x512xi1> to vector<16x512xi32>
    %36 = arith.sitofp %35 : vector<16x512xi32> to vector<16x512xf32>
    %37 = arith.truncf %36 : vector<16x512xf32> to vector<16x512xbf16>
    %c0_13 = arith.constant 0 : index
    %c0_14 = arith.constant 0 : index
    %38 = vector.load %arg20[%c0_13, %c0_14] : memref<16x128xf32, #tpu.memory_space<vmem>>, vector<16x128xf32>
    %cst_15 = arith.constant dense<0.000000e+00> : vector<16x128xf32>
    %39 = tpu.matmul %37, %17, %cst_15 {dimension_numbers = #tpu.dot_dimension_numbers<[1], [1], [0], [0], [0, 0, 1, 0], [], []>} : vector<16x512xbf16>, vector<128x512xbf16>, vector<16x128xf32> -> vector<16x128xf32>
    %40 = arith.addf %38, %39 : vector<16x128xf32>
    %c0_16 = arith.constant 0 : index
    %c0_17 = arith.constant 0 : index
    %41 = vector.load %arg20[%c0_16, %c0_17] : memref<16x128xf32, #tpu.memory_space<vmem>>, vector<16x128xf32>
    tpu.vector_store %arg20[%c0_16, %c0_17], %40 {strides = array<i32>} : memref<16x128xf32, #tpu.memory_space<vmem>>, vector<16x128xf32>,
    %c1_i32 = arith.constant 1 : i32
    %42 = arith.cmpi eq, %arg0, %c1_i32 : i32
    %43 = arith.extui %42 : i1 to i32
    %c0_i32_18 = arith.constant 0 : i32
    %44 = arith.cmpi ne, %43, %c0_i32_18 : i32
    scf.if %44 {
      %45 = math.floor %6 : vector<16x1xf32>
      %46 = math.ceil %4 : vector<16x1xf32>
      %47 = arith.subf %45, %46 : vector<16x1xf32>
      %cst_19 = arith.constant 1.000000e+00 : f32
      %48 = vector.broadcast %cst_19 : f32 to vector<16x1xf32>
      %49 = arith.addf %47, %48 : vector<16x1xf32>
      %cst_20 = arith.constant 0.000000e+00 : f32
      %50 = vector.broadcast %cst_20 : f32 to vector<16x1xf32>
      %51 = arith.maximumf %49, %50 : vector<16x1xf32>
      %52 = math.floor %7 : vector<16x1xf32>
      %53 = math.ceil %5 : vector<16x1xf32>
      %54 = arith.subf %52, %53 : vector<16x1xf32>
      %cst_21 = arith.constant 1.000000e+00 : f32
      %55 = vector.broadcast %cst_21 : f32 to vector<16x1xf32>
      %56 = arith.addf %54, %55 : vector<16x1xf32>
      %cst_22 = arith.constant 0.000000e+00 : f32
      %57 = vector.broadcast %cst_22 : f32 to vector<16x1xf32>
      %58 = arith.maximumf %56, %57 : vector<16x1xf32>
      %59 = arith.mulf %51, %58 : vector<16x1xf32>
      %cst_23 = arith.constant 1.000000e+00 : f32
      %60 = vector.broadcast %cst_23 : f32 to vector<16x1xf32>
      %61 = arith.maximumf %59, %60 : vector<16x1xf32>
      %c0_24 = arith.constant 0 : index
      %c0_25 = arith.constant 0 : index
      %62 = vector.load %arg20[%c0_24, %c0_25] : memref<16x128xf32, #tpu.memory_space<vmem>>, vector<16x128xf32>
      %63 = tpu.reciprocal %61 {approx = true} : vector<16x1xf32> -> vector<16x1xf32>
      %64 = vector.broadcast %63 : vector<16x1xf32> to vector<16x128xf32>
      %65 = arith.mulf %62, %64 : vector<16x128xf32>
      %66 = arith.truncf %65 : vector<16x128xf32> to vector<16x128xbf16>
      %c0_26 = arith.constant 0 : index
      %c0_27 = arith.constant 0 : index
      %67 = vector.load %arg8[%c0_26, %c0_27] : memref<128x128xbf16, #tpu.memory_space<vmem>>, vector<128x128xbf16>
      %cst_28 = arith.constant dense<0.000000e+00> : vector<16x128xf32>
      %68 = tpu.matmul %66, %67, %cst_28 {dimension_numbers = #tpu.dot_dimension_numbers<[1], [0], [0], [1], [0, 0, 1, 1], [], []>} : vector<16x128xbf16>, vector<128x128xbf16>, vector<16x128xf32> -> vector<16x128xf32>
      %c0_29 = arith.constant 0 : index
      %c0_30 = arith.constant 0 : index
      %69 = vector.load %arg9[%c0_29, %c0_30] : memref<1x128xf32, #tpu.memory_space<vmem>>, vector<1x128xf32>
      %70 = vector.broadcast %69 : vector<1x128xf32> to vector<16x128xf32>
      %71 = arith.addf %68, %70 : vector<16x128xf32>
      %cst_31 = arith.constant 0.000000e+00 : f32
      %72 = vector.broadcast %cst_31 : f32 to vector<16x128xf32>
      %73 = arith.maximumf %71, %72 : vector<16x128xf32>
      %c0_32 = arith.constant 0 : index
      %c0_33 = arith.constant 0 : index
      %74 = vector.load %arg5[%c0_32, %c0_33] : memref<4x16xf32, #tpu.memory_space<vmem>>, vector<4x16xf32>
      %75 = vector.extract_strided_slice %74 {offsets = [0, 0], sizes = [1, 16], strides = [1, 1]} : vector<4x16xf32> to vector<1x16xf32>
      %76 = vector.extract_strided_slice %74 {offsets = [1, 0], sizes = [1, 16], strides = [1, 1]} : vector<4x16xf32> to vector<1x16xf32>
      %77 = vector.extract_strided_slice %74 {offsets = [2, 0], sizes = [1, 16], strides = [1, 1]} : vector<4x16xf32> to vector<1x16xf32>
      %78 = vector.extract_strided_slice %74 {offsets = [3, 0], sizes = [1, 16], strides = [1, 1]} : vector<4x16xf32> to vector<1x16xf32>
      %79 = arith.subf %6, %4 : vector<16x1xf32>
      %cst_34 = arith.constant 1.000000e+00 : f32
      %80 = vector.broadcast %cst_34 : f32 to vector<16x1xf32>
      %81 = arith.addf %79, %80 : vector<16x1xf32>
      %82 = arith.subf %7, %5 : vector<16x1xf32>
      %cst_35 = arith.constant 1.000000e+00 : f32
      %83 = vector.broadcast %cst_35 : f32 to vector<16x1xf32>
      %84 = arith.addf %82, %83 : vector<16x1xf32>
      %85 = arith.mulf %81, %84 : vector<16x1xf32>
      %86 = arith.subf %77, %75 : vector<1x16xf32>
      %cst_36 = arith.constant 1.000000e+00 : f32
      %87 = vector.broadcast %cst_36 : f32 to vector<1x16xf32>
      %88 = arith.addf %86, %87 : vector<1x16xf32>
      %89 = arith.subf %78, %76 : vector<1x16xf32>
      %cst_37 = arith.constant 1.000000e+00 : f32
      %90 = vector.broadcast %cst_37 : f32 to vector<1x16xf32>
      %91 = arith.addf %89, %90 : vector<1x16xf32>
      %92 = arith.mulf %88, %91 : vector<1x16xf32>
      %93 = vector.broadcast %6 : vector<16x1xf32> to vector<16x16xf32>
      %94 = vector.broadcast %77 : vector<1x16xf32> to vector<16x16xf32>
      %95 = arith.minimumf %93, %94 : vector<16x16xf32>
      %96 = vector.broadcast %4 : vector<16x1xf32> to vector<16x16xf32>
      %97 = vector.broadcast %75 : vector<1x16xf32> to vector<16x16xf32>
      %98 = arith.maximumf %96, %97 : vector<16x16xf32>
      %99 = arith.subf %95, %98 : vector<16x16xf32>
      %cst_38 = arith.constant 1.000000e+00 : f32
      %100 = vector.broadcast %cst_38 : f32 to vector<16x16xf32>
      %101 = arith.addf %99, %100 : vector<16x16xf32>
      %cst_39 = arith.constant 0.000000e+00 : f32
      %102 = vector.broadcast %cst_39 : f32 to vector<16x16xf32>
      %103 = arith.maximumf %101, %102 : vector<16x16xf32>
      %104 = vector.broadcast %7 : vector<16x1xf32> to vector<16x16xf32>
      %105 = vector.broadcast %78 : vector<1x16xf32> to vector<16x16xf32>
      %106 = arith.minimumf %104, %105 : vector<16x16xf32>
      %107 = vector.broadcast %5 : vector<16x1xf32> to vector<16x16xf32>
      %108 = vector.broadcast %76 : vector<1x16xf32> to vector<16x16xf32>
      %109 = arith.maximumf %107, %108 : vector<16x16xf32>
      %110 = arith.subf %106, %109 : vector<16x16xf32>
      %cst_40 = arith.constant 1.000000e+00 : f32
      %111 = vector.broadcast %cst_40 : f32 to vector<16x16xf32>
      %112 = arith.addf %110, %111 : vector<16x16xf32>
      %cst_41 = arith.constant 0.000000e+00 : f32
      %113 = vector.broadcast %cst_41 : f32 to vector<16x16xf32>
      %114 = arith.maximumf %112, %113 : vector<16x16xf32>
      %115 = arith.mulf %103, %114 : vector<16x16xf32>
      %116 = vector.broadcast %85 : vector<16x1xf32> to vector<16x16xf32>
      %117 = vector.broadcast %92 : vector<1x16xf32> to vector<16x16xf32>
      %118 = arith.addf %116, %117 : vector<16x16xf32>
      %119 = arith.subf %118, %115 : vector<16x16xf32>
      %120 = tpu.reciprocal %119 {approx = true} : vector<16x16xf32> -> vector<16x16xf32>
      %121 = arith.mulf %115, %120 : vector<16x16xf32>
      %122 = arith.addf %4, %6 : vector<16x1xf32>
      %cst_42 = arith.constant 5.000000e-01 : f32
      %123 = vector.broadcast %cst_42 : f32 to vector<16x1xf32>
      %124 = arith.mulf %123, %122 : vector<16x1xf32>
      %125 = arith.addf %5, %7 : vector<16x1xf32>
      %cst_43 = arith.constant 5.000000e-01 : f32
      %126 = vector.broadcast %cst_43 : f32 to vector<16x1xf32>
      %127 = arith.mulf %126, %125 : vector<16x1xf32>
      %128 = arith.addf %75, %77 : vector<1x16xf32>
      %cst_44 = arith.constant 5.000000e-01 : f32
      %129 = vector.broadcast %cst_44 : f32 to vector<1x16xf32>
      %130 = arith.mulf %129, %128 : vector<1x16xf32>
      %131 = arith.addf %76, %78 : vector<1x16xf32>
      %cst_45 = arith.constant 5.000000e-01 : f32
      %132 = vector.broadcast %cst_45 : f32 to vector<1x16xf32>
      %133 = arith.mulf %132, %131 : vector<1x16xf32>
      %134 = vector.broadcast %124 : vector<16x1xf32> to vector<16x16xf32>
      %135 = vector.broadcast %130 : vector<1x16xf32> to vector<16x16xf32>
      %136 = arith.subf %134, %135 : vector<16x16xf32>
      %137 = vector.broadcast %127 : vector<16x1xf32> to vector<16x16xf32>
      %138 = vector.broadcast %133 : vector<1x16xf32> to vector<16x16xf32>
      %139 = arith.subf %137, %138 : vector<16x16xf32>
      %140 = arith.mulf %136, %136 : vector<16x16xf32>
      %141 = arith.mulf %139, %139 : vector<16x16xf32>
      %142 = arith.addf %140, %141 : vector<16x16xf32>
      %143 = math.sqrt %142 : vector<16x16xf32>
      %cst_46 = arith.constant 0.0220970865 : f32
      %144 = vector.broadcast %cst_46 : f32 to vector<16x16xf32>
      %145 = arith.mulf %143, %144 : vector<16x16xf32>
      %cst_47 = arith.constant 0.699999988 : f32
      %146 = vector.broadcast %cst_47 : f32 to vector<16x16xf32>
      %147 = arith.cmpf oge, %121, %146 : vector<16x16xf32>
      %cst_48 = arith.constant 0.00999999977 : f32
      %148 = vector.broadcast %cst_48 : f32 to vector<16x16xf32>
      %149 = arith.cmpf olt, %145, %148 : vector<16x16xf32>
      %150 = arith.ori %147, %149 : vector<16x16xi1>
      %151 = arith.extui %150 : vector<16x16xi1> to vector<16x16xi32>
      %152 = arith.sitofp %151 : vector<16x16xi32> to vector<16x16xf32>
      %153 = arith.truncf %152 : vector<16x16xf32> to vector<16x16xbf16>
      %154 = tpu.iota {dimensions = array<i32: 0>} : vector<16x16xi32>
      %155 = tpu.iota {dimensions = array<i32: 1>} : vector<16x16xi32>
      %156 = arith.cmpi sle, %154, %155 : vector<16x16xi32>
      %157 = arith.extui %156 : vector<16x16xi1> to vector<16x16xi32>
      %158 = arith.sitofp %157 : vector<16x16xi32> to vector<16x16xf32>
      %159 = arith.truncf %158 : vector<16x16xf32> to vector<16x16xbf16>
      %cst_49 = arith.constant dense<0.000000e+00> : vector<16x16xf32>
      %160 = tpu.matmul %153, %159, %cst_49 {dimension_numbers = #tpu.dot_dimension_numbers<[1], [0], [0], [1], [0, 0, 1, 1], [], []>} : vector<16x16xbf16>, vector<16x16xbf16>, vector<16x16xf32> -> vector<16x16xf32>
      %cst_50 = arith.constant 0.000000e+00 : bf16
      %161 = vector.broadcast %cst_50 : bf16 to vector<16x16xbf16>
      %162 = arith.cmpf ogt, %153, %161 : vector<16x16xbf16>
      %cst_51 = arith.constant 4.000000e+00 : f32
      %163 = vector.broadcast %cst_51 : f32 to vector<16x16xf32>
      %164 = arith.cmpf ole, %160, %163 : vector<16x16xf32>
      %165 = arith.andi %162, %164 : vector<16x16xi1>
      %cst_52 = arith.constant 1.000000e+00 : f32
      %cst_53 = arith.constant 0.000000e+00 : f32
      %166 = vector.broadcast %cst_52 : f32 to vector<16x16xf32>
      %167 = vector.broadcast %cst_53 : f32 to vector<16x16xf32>
      %168 = arith.select %165, %166, %167 : vector<16x16xi1>, vector<16x16xf32>
      %169 = arith.cmpi eq, %154, %155 : vector<16x16xi32>
      %170 = arith.extui %169 : vector<16x16xi1> to vector<16x16xi32>
      %171 = arith.sitofp %170 : vector<16x16xi32> to vector<16x16xf32>
      %172 = arith.maximumf %171, %168 : vector<16x16xf32>
      %173 = arith.mulf %73, %73 : vector<16x128xf32>
      %cst_54 = arith.constant dense<0.000000e+00> : vector<16xf32>
      %174 = vector.multi_reduction <add>, %173, %cst_54 [1] : vector<16x128xf32> to vector<16xf32>
      %175 = vector.shape_cast %174 : vector<16xf32> to vector<16x1xf32>
      %176 = math.sqrt %175 : vector<16x1xf32>
      %cst_55 = arith.constant 9.99999993E-9 : f32
      %177 = vector.broadcast %cst_55 : f32 to vector<16x1xf32>
      %178 = arith.addf %176, %177 : vector<16x1xf32>
      %179 = tpu.reciprocal %178 {approx = true} : vector<16x1xf32> -> vector<16x1xf32>
      %180 = vector.broadcast %179 : vector<16x1xf32> to vector<16x128xf32>
      %181 = arith.mulf %73, %180 : vector<16x128xf32>
      %182 = arith.truncf %181 : vector<16x128xf32> to vector<16x128xbf16>
      %cst_56 = arith.constant dense<0.000000e+00> : vector<16x16xf32>
      %183 = tpu.matmul %182, %182, %cst_56 {dimension_numbers = #tpu.dot_dimension_numbers<[1], [1], [0], [0], [0, 0, 1, 0], [], []>} : vector<16x128xbf16>, vector<16x128xbf16>, vector<16x16xf32> -> vector<16x16xf32>
      %184 = arith.mulf %172, %183 : vector<16x16xf32>
      %185 = arith.truncf %184 : vector<16x16xf32> to vector<16x16xbf16>
      %186 = arith.truncf %73 : vector<16x128xf32> to vector<16x128xbf16>
      %c0_57 = arith.constant 0 : index
      %c0_58 = arith.constant 0 : index
      %187 = vector.load %arg10[%c0_57, %c0_58] : memref<128x128xbf16, #tpu.memory_space<vmem>>, vector<128x128xbf16>
      %cst_59 = arith.constant dense<0.000000e+00> : vector<16x128xf32>
      %188 = tpu.matmul %186, %187, %cst_59 {dimension_numbers = #tpu.dot_dimension_numbers<[1], [0], [0], [1], [0, 0, 1, 1], [], []>} : vector<16x128xbf16>, vector<128x128xbf16>, vector<16x128xf32> -> vector<16x128xf32>
      %189 = arith.truncf %188 : vector<16x128xf32> to vector<16x128xbf16>
      %cst_60 = arith.constant dense<0.000000e+00> : vector<16x128xf32>
      %190 = tpu.matmul %185, %189, %cst_60 {dimension_numbers = #tpu.dot_dimension_numbers<[1], [0], [0], [1], [0, 0, 1, 1], [], []>} : vector<16x16xbf16>, vector<16x128xbf16>, vector<16x128xf32> -> vector<16x128xf32>
      %c0_61 = arith.constant 0 : index
      %c0_62 = arith.constant 0 : index
      %191 = vector.load %arg11[%c0_61, %c0_62] : memref<1x128xf32, #tpu.memory_space<vmem>>, vector<1x128xf32>
      %192 = vector.broadcast %191 : vector<1x128xf32> to vector<16x128xf32>
      %193 = arith.addf %190, %192 : vector<16x128xf32>
      %cst_63 = arith.constant 0.000000e+00 : f32
      %194 = vector.broadcast %cst_63 : f32 to vector<16x128xf32>
      %195 = arith.maximumf %193, %194 : vector<16x128xf32>
      %196 = arith.truncf %195 : vector<16x128xf32> to vector<16x128xbf16>
      %c0_64 = arith.constant 0 : index
      %c0_65 = arith.constant 0 : index
      %197 = vector.load %arg12[%c0_64, %c0_65] : memref<128x128xbf16, #tpu.memory_space<vmem>>, vector<128x128xbf16>
      %cst_66 = arith.constant dense<0.000000e+00> : vector<16x128xf32>
      %198 = tpu.matmul %196, %197, %cst_66 {dimension_numbers = #tpu.dot_dimension_numbers<[1], [0], [0], [1], [0, 0, 1, 1], [], []>} : vector<16x128xbf16>, vector<128x128xbf16>, vector<16x128xf32> -> vector<16x128xf32>
      %199 = arith.truncf %198 : vector<16x128xf32> to vector<16x128xbf16>
      %cst_67 = arith.constant dense<0.000000e+00> : vector<16x128xf32>
      %200 = tpu.matmul %185, %199, %cst_67 {dimension_numbers = #tpu.dot_dimension_numbers<[1], [0], [0], [1], [0, 0, 1, 1], [], []>} : vector<16x16xbf16>, vector<16x128xbf16>, vector<16x128xf32> -> vector<16x128xf32>
      %c0_68 = arith.constant 0 : index
      %c0_69 = arith.constant 0 : index
      %201 = vector.load %arg13[%c0_68, %c0_69] : memref<1x128xf32, #tpu.memory_space<vmem>>, vector<1x128xf32>
      %202 = vector.broadcast %201 : vector<1x128xf32> to vector<16x128xf32>
      %203 = arith.addf %200, %202 : vector<16x128xf32>
      %cst_70 = arith.constant 0.000000e+00 : f32
      %204 = vector.broadcast %cst_70 : f32 to vector<16x128xf32>
      %205 = arith.maximumf %203, %204 : vector<16x128xf32>
      %206 = arith.truncf %205 : vector<16x128xf32> to vector<16x128xbf16>
      %c0_71 = arith.constant 0 : index
      %c0_72 = arith.constant 0 : index
      %207 = vector.load %arg14[%c0_71, %c0_72] : memref<128x128xbf16, #tpu.memory_space<vmem>>, vector<128x128xbf16>
      %cst_73 = arith.constant dense<0.000000e+00> : vector<16x128xf32>
      %208 = tpu.matmul %206, %207, %cst_73 {dimension_numbers = #tpu.dot_dimension_numbers<[1], [0], [0], [1], [0, 0, 1, 1], [], []>} : vector<16x128xbf16>, vector<128x128xbf16>, vector<16x128xf32> -> vector<16x128xf32>
      %c0_74 = arith.constant 0 : index
      %c0_75 = arith.constant 0 : index
      %209 = vector.load %arg15[%c0_74, %c0_75] : memref<1x128xf32, #tpu.memory_space<vmem>>, vector<1x128xf32>
      %210 = vector.broadcast %209 : vector<1x128xf32> to vector<16x128xf32>
      %211 = arith.addf %208, %210 : vector<16x128xf32>
      %cst_76 = arith.constant dense<0xFF800000> : vector<16xf32>
      %212 = vector.multi_reduction <maximumf>, %211, %cst_76 [1] : vector<16x128xf32> to vector<16xf32>
      %213 = vector.shape_cast %212 : vector<16xf32> to vector<16x1xf32>
      %214 = vector.broadcast %213 : vector<16x1xf32> to vector<16x128xf32>
      %215 = arith.subf %211, %214 : vector<16x128xf32>
      %216 = math.exp %215 : vector<16x128xf32>
      %cst_77 = arith.constant dense<0.000000e+00> : vector<16xf32>
      %217 = vector.multi_reduction <add>, %216, %cst_77 [1] : vector<16x128xf32> to vector<16xf32>
      %218 = vector.shape_cast %217 : vector<16xf32> to vector<16x1xf32>
      %219 = vector.broadcast %218 : vector<16x1xf32> to vector<16x128xf32>
      %220 = arith.divf %216, %219 : vector<16x128xf32>
      %c0_78 = arith.constant 0 : index
      %c0_79 = arith.constant 0 : index
      %221 = vector.load %arg18[%c0_78, %c0_79] : memref<16x128xf32, #tpu.memory_space<vmem>>, vector<16x128xf32>
      tpu.vector_store %arg18[%c0_78, %c0_79], %220 {strides = array<i32>} : memref<16x128xf32, #tpu.memory_space<vmem>>, vector<16x128xf32>,
      %c0_80 = arith.constant 0 : index
      %c0_81 = arith.constant 0 : index
      %222 = vector.load %arg16[%c0_80, %c0_81] : memref<128x128xbf16, #tpu.memory_space<vmem>>, vector<128x128xbf16>
      %cst_82 = arith.constant dense<0.000000e+00> : vector<16x128xf32>
      %223 = tpu.matmul %206, %222, %cst_82 {dimension_numbers = #tpu.dot_dimension_numbers<[1], [0], [0], [1], [0, 0, 1, 1], [], []>} : vector<16x128xbf16>, vector<128x128xbf16>, vector<16x128xf32> -> vector<16x128xf32>
      %c0_83 = arith.constant 0 : index
      %c0_84 = arith.constant 0 : index
      %224 = vector.load %arg17[%c0_83, %c0_84] : memref<1x128xf32, #tpu.memory_space<vmem>>, vector<1x128xf32>
      %225 = vector.broadcast %224 : vector<1x128xf32> to vector<16x128xf32>
      %226 = arith.addf %223, %225 : vector<16x128xf32>
      %c0_85 = arith.constant 0 : index
      %c0_86 = arith.constant 0 : index
      %227 = vector.load %arg19[%c0_85, %c0_86] : memref<16x128xf32, #tpu.memory_space<vmem>>, vector<16x128xf32>
      tpu.vector_store %arg19[%c0_85, %c0_86], %226 {strides = array<i32>} : memref<16x128xf32, #tpu.memory_space<vmem>>, vector<16x128xf32>,
    } else {
    }
    return
  }
  func.func @transform_0(%arg0: i32) -> (i32, i32) {
    %c0_i32 = arith.constant 0 : i32
    %c0_i32_0 = arith.constant 0 : i32
    return %c0_i32, %arg0 : i32, i32
  }
  func.func @transform_1(%arg0: i32) -> (i32, i32) {
    %c0_i32 = arith.constant 0 : i32
    %c0_i32_0 = arith.constant 0 : i32
    return %c0_i32, %arg0 : i32, i32
  }
  func.func @transform_2(%arg0: i32) -> (i32, i32) {
    %c0_i32 = arith.constant 0 : i32
    %c0_i32_0 = arith.constant 0 : i32
    return %c0_i32, %arg0 : i32, i32
  }
  func.func @transform_3(%arg0: i32) -> (i32, i32) {
    %c0_i32 = arith.constant 0 : i32
    %c0_i32_0 = arith.constant 0 : i32
    %c0_i32_1 = arith.constant 0 : i32
    return %c0_i32, %c0_i32_0 : i32, i32
  }
  func.func @transform_4(%arg0: i32) -> (i32, i32) {
    %c0_i32 = arith.constant 0 : i32
    %c0_i32_0 = arith.constant 0 : i32
    %c0_i32_1 = arith.constant 0 : i32
    return %c0_i32, %c0_i32_0 : i32, i32
  }
  func.func @transform_5(%arg0: i32) -> (i32, i32) {
    %c0_i32 = arith.constant 0 : i32
    %c0_i32_0 = arith.constant 0 : i32
    %c0_i32_1 = arith.constant 0 : i32
    return %c0_i32, %c0_i32_0 : i32, i32
  }
  func.func @transform_6(%arg0: i32) -> (i32, i32) {
    %c0_i32 = arith.constant 0 : i32
    %c0_i32_0 = arith.constant 0 : i32
    %c0_i32_1 = arith.constant 0 : i32
    return %c0_i32, %c0_i32_0 : i32, i32
  }
  func.func @transform_7(%arg0: i32) -> (i32, i32) {
    %c0_i32 = arith.constant 0 : i32
    %c0_i32_0 = arith.constant 0 : i32
    %c0_i32_1 = arith.constant 0 : i32
    return %c0_i32, %c0_i32_0 : i32, i32
  }
  func.func @transform_8(%arg0: i32) -> (i32, i32) {
    %c0_i32 = arith.constant 0 : i32
    %c0_i32_0 = arith.constant 0 : i32
    %c0_i32_1 = arith.constant 0 : i32
    return %c0_i32, %c0_i32_0 : i32, i32
  }
  func.func @transform_9(%arg0: i32) -> (i32, i32) {
    %c0_i32 = arith.constant 0 : i32
    %c0_i32_0 = arith.constant 0 : i32
    %c0_i32_1 = arith.constant 0 : i32
    return %c0_i32, %c0_i32_0 : i32, i32
  }
  func.func @transform_10(%arg0: i32) -> (i32, i32) {
    %c0_i32 = arith.constant 0 : i32
    %c0_i32_0 = arith.constant 0 : i32
    %c0_i32_1 = arith.constant 0 : i32
    return %c0_i32, %c0_i32_0 : i32, i32
  }
  func.func @transform_11(%arg0: i32) -> (i32, i32) {
    %c0_i32 = arith.constant 0 : i32
    %c0_i32_0 = arith.constant 0 : i32
    %c0_i32_1 = arith.constant 0 : i32
    return %c0_i32, %c0_i32_0 : i32, i32
  }
  func.func @transform_12(%arg0: i32) -> (i32, i32) {
    %c0_i32 = arith.constant 0 : i32
    %c0_i32_0 = arith.constant 0 : i32
    %c0_i32_1 = arith.constant 0 : i32
    return %c0_i32, %c0_i32_0 : i32, i32
  }
  func.func @transform_13(%arg0: i32) -> (i32, i32) {
    %c0_i32 = arith.constant 0 : i32
    %c0_i32_0 = arith.constant 0 : i32
    %c0_i32_1 = arith.constant 0 : i32
    return %c0_i32, %c0_i32_0 : i32, i32
  }
  func.func @transform_14(%arg0: i32) -> (i32, i32) {
    %c0_i32 = arith.constant 0 : i32
    %c0_i32_0 = arith.constant 0 : i32
    %c0_i32_1 = arith.constant 0 : i32
    return %c0_i32, %c0_i32_0 : i32, i32
  }
  func.func @transform_15(%arg0: i32) -> (i32, i32) {
    %c0_i32 = arith.constant 0 : i32
    %c0_i32_0 = arith.constant 0 : i32
    %c0_i32_1 = arith.constant 0 : i32
    return %c0_i32, %c0_i32_0 : i32, i32
  }
  func.func @transform_16(%arg0: i32) -> (i32, i32) {
    %c0_i32 = arith.constant 0 : i32
    %c0_i32_0 = arith.constant 0 : i32
    %c0_i32_1 = arith.constant 0 : i32
    return %c0_i32, %c0_i32_0 : i32, i32
  }
  func.func @transform_17(%arg0: i32) -> (i32, i32) {
    %c0_i32 = arith.constant 0 : i32
    %c0_i32_0 = arith.constant 0 : i32
    %c0_i32_1 = arith.constant 0 : i32
    return %c0_i32, %c0_i32_0 : i32, i32
  }
  func.func @transform_18(%arg0: i32) -> (i32, i32) {
    %c0_i32 = arith.constant 0 : i32
    %c0_i32_0 = arith.constant 0 : i32
    %c0_i32_1 = arith.constant 0 : i32
    return %c0_i32, %c0_i32_0 : i32, i32
  }
}

</mosaic_0001>

<llo_original>
// kernel: tpu_custom_call.1
$region0: #{tpu_custom_call.1}
  #allocation0 [shape = 'u32[]', space=smem, size = 0x4, offset = 0x4, fixed_abs, tag = 'smem constant byte address 0x4 - core index']
  #allocation1 [shape = 'u32[72,128]{1,0:T(1,128)}', space=vmem, size = 0x9000, scoped, tag = 'internal scratch']
  #allocation2 [shape = 'f32[16,128]{1,0:T(8,128)}', space=vmem, size = 0x2000, scoped, tag = 'scratch operand']
  %s0 = inlined_call_operand.hbm [shape: f32[3,1024], index: 0, kind: input, shape index: {}]
  %s1 = inlined_call_operand.vmem [shape: f32[1,1024], index: 1, kind: input, shape index: {}]
  %s2 = inlined_call_operand.vmem [shape: f32[1,1024], index: 2, kind: input, shape index: {}]
  %s3 = inlined_call_operand.vmem [shape: f32[16,4], index: 3, kind: input, shape index: {}]
  %s4 = inlined_call_operand.vmem [shape: f32[4,16], index: 4, kind: input, shape index: {}]
  %s5 = inlined_call_operand.vmem [shape: bf16[128,3], index: 5, kind: input, shape index: {}]
  %s6 = inlined_call_operand.vmem [shape: f32[128,1], index: 6, kind: input, shape index: {}]
  %s7 = inlined_call_operand.vmem [shape: bf16[128,128], index: 7, kind: input, shape index: {}]
  %s8 = inlined_call_operand.vmem [shape: f32[1,128], index: 8, kind: input, shape index: {}]
  %s9 = inlined_call_operand.vmem [shape: bf16[128,128], index: 9, kind: input, shape index: {}]
  %s10 = inlined_call_operand.vmem [shape: f32[1,128], index: 10, kind: input, shape index: {}]
  %s11 = inlined_call_operand.vmem [shape: bf16[128,128], index: 11, kind: input, shape index: {}]
  %s12 = inlined_call_operand.vmem [shape: f32[1,128], index: 12, kind: input, shape index: {}]
  %s13 = inlined_call_operand.hbm [shape: bf16[128,128], index: 13, kind: input, shape index: {}]
  %s14 = inlined_call_operand.vmem [shape: f32[1,128], index: 14, kind: input, shape index: {}]
  %s15 = inlined_call_operand.hbm [shape: bf16[128,128], index: 15, kind: input, shape index: {}]
  %s16 = inlined_call_operand.vmem [shape: f32[1,128], index: 16, kind: input, shape index: {}]
  %s17 = inlined_call_operand.hbm [shape: f32[16,128], index: 17, kind: output, shape index: {0}]
  %s18 = inlined_call_operand.hbm [shape: f32[16,128], index: 18, kind: output, shape index: {1}]
  %19 = xla_tuple %s17, %s18
  %s20 = sld [smem:[#allocation0]]
  $region129: #{tpu_custom_call.1} parent=0
    _
  %s22 = ssub.s32 1, %s20
  %s23 = scalar_select 0, %s22, %s20
  $region1: #{tpu_custom_call.1} parent=0
    #allocation3 [shape = 'u8[16384]{0}', space=vmem, size = 0x4000, scoped, tag = 'input window, operand 0']
    #allocation4 [shape = 's32[2]{0}', space=sflag, size = 0x8, scoped, tag = 'scoped memory for tpu_custom_call.1']
    #allocation5 [shape = 's32[2]{0}', space=sflag, size = 0x8, scoped, tag = 'scoped memory for tpu_custom_call.1']
    #allocation6 [shape = 'u8[32768]{0}', space=vmem, size = 0x8000, scoped, tag = 'input window, operand 13, single buffered']
    #allocation7 [shape = 's32[1]{0}', space=sflag, size = 0x4, scoped, tag = 'scoped memory for tpu_custom_call.1']
    #allocation8 [shape = 'u8[32768]{0}', space=vmem, size = 0x8000, scoped, tag = 'input window, operand 15, single buffered']
    #allocation9 [shape = 'u8[8192]{0}', space=vmem, size = 0x2000, scoped, tag = 'output window, operand 0, single buffered']
    #allocation10 [shape = 'u8[8192]{0}', space=vmem, size = 0x2000, scoped, tag = 'output window, operand 1, single buffered']
    #allocation11 [shape = 's32[1]{0}', space=sflag, size = 0x4, scoped, tag = 'scoped memory for tpu_custom_call.1']
    %24 = vsyncpa [#allocation4], 0
    %s25 = scalar_lea.sflag [#allocation4], 1
    %26 = vsyncpa %s25, 0
    %27 = vsyncpa [#allocation7], 0
    %28 = vsyncpa [#allocation5], 0
    %29 = vsyncpa [#allocation11], 0
    loop: start=0, step=1, limit=4
    $region2: #{tpu_custom_call.1} parent=1 // loop_pre_header
      _
    $region3: #{tpu_custom_call.1} parent=1 // loop_header
      %s31 = sphi 0, %s35
      %p32 = scmp.ge.s32.totalorder %s31, 4
      %s41 = sphi 0, %s43
      %s44 = sphi 0, %s41
      %s45 = sphi 0, %s44
      %s61 = sphi 0, %s45
      %s67 = sphi 0, %s69
      %s70 = sphi 0, %s67
      %s71 = sphi 0, %s70
      %s87 = sphi 0, %s71
      %s93 = sphi 0, %s95
      %s96 = sphi 0, %s93
      %s97 = sphi 0, %s96
      %s113 = sphi 0, %s97
      %s117 = sphi 0, %s117
      %s119 = sphi 0, %s117
      %s120 = sphi 0, %s119
      %s134 = sphi 0, %s120
      %s138 = sphi 0, %s138
      %s140 = sphi 0, %s138
      %s141 = sphi 0, %s140
      %s155 = sphi 0, %s141
      %s159 = sphi 0, %s159
      %s161 = sphi 0, %s159
      %s162 = sphi 0, %s161
      %s176 = sphi 0, %s162
      %s180 = sphi 0, %s180
      %s182 = sphi 0, %s180
      %s183 = sphi 0, %s182
      %s197 = sphi 0, %s183
      %s201 = sphi 0, %s201
      %s203 = sphi 0, %s201
      %s204 = sphi 0, %s203
      %s218 = sphi 0, %s204
      %s222 = sphi 0, %s222
      %s224 = sphi 0, %s222
      %s225 = sphi 0, %s224
      %s239 = sphi 0, %s225
      %s243 = sphi 0, %s243
      %s245 = sphi 0, %s243
      %s246 = sphi 0, %s245
      %s260 = sphi 0, %s246
      %s264 = sphi 0, %s264
      %s266 = sphi 0, %s264
      %s267 = sphi 0, %s266
      %s281 = sphi 0, %s267
      %s285 = sphi 0, %s285
      %s287 = sphi 0, %s285
      %s288 = sphi 0, %s287
      %s302 = sphi 0, %s288
      %s306 = sphi 0, %s306
      %s308 = sphi 0, %s306
      %s309 = sphi 0, %s308
      %s323 = sphi 0, %s309
      %s327 = sphi 0, %s327
      %s329 = sphi 0, %s327
      %s330 = sphi 0, %s329
      %s344 = sphi 0, %s330
      %s348 = sphi 0, %s348
      %s350 = sphi 0, %s348
      %s351 = sphi 0, %s350
      %s365 = sphi 0, %s351
      %s369 = sphi 0, %s369
      %s371 = sphi 0, %s369
      %s372 = sphi 0, %s371
      %s386 = sphi 0, %s372
      %s390 = sphi 0, %s390
      %s392 = sphi 0, %s390
      %s393 = sphi 0, %s392
      %s407 = sphi 0, %s393
      %s411 = sphi 0, %s411
      %s413 = sphi 0, %s411
      %s414 = sphi 0, %s413
      %s428 = sphi 0, %s414
      %s432 = sphi 0, %s432
      %s434 = sphi 0, %s432
      %s435 = sphi 0, %s434
      %s449 = sphi 0, %s435
    $region4: #{tpu_custom_call.1} parent=1 // loop_header_branch
      %34 = sbr.rel (%p32) target = $region8
    $region5: #{tpu_custom_call.1} parent=1 // loop_body
      %s36 = ssub.s32 %s31, 1
      %s37 = ssub.s32 %s31, 2
      %s38 = sadd.s32 %s31, 1
      %s39 = ssub.s32 %s31, %s38
      %p40 = scmp.eq.s32.totalorder %s39, 0
      %s42 = sadd.s32 %s41, 1
      %s43 = scalar_select %p40, %s41, %s42
      %p46 = pneg %p40
      %p47 = scmp.eq.s32.totalorder %s31, 1
      %p48 = por %p46, %p47
      %p49 = scmp.ne.s32.totalorder %s41, %s44
      %p50 = scmp.eq.s32.totalorder %s31, 0
      %p51 = por %p49, %p50
      %p52 = scmp.ne.s32.totalorder %s41, %s44
      %p53 = scmp.eq.s32.totalorder %s36, 1
      %p54 = por %p52, %p53
      %p55 = scmp.ne.s32.totalorder %s44, %s45
      %p56 = scmp.eq.s32.totalorder %s36, 0
      %p57 = por %p55, %p56
      %p58 = scmp.ne.s32.totalorder %s44, %s45
      %p59 = scmp.eq.s32.totalorder %s37, 1
      %p60 = por %p58, %p59
      %p62 = scmp.ne.s32.totalorder %s45, %s61
      %p63 = scmp.eq.s32.totalorder %s37, 0
      %p64 = por %p62, %p63
      %s65 = ssub.s32 %s31, %s38
      %p66 = scmp.eq.s32.totalorder %s65, 0
      %s68 = sadd.s32 %s67, 1
      %s69 = scalar_select %p66, %s67, %s68
      %p72 = pneg %p66
      %p73 = scmp.eq.s32.totalorder %s31, 1
      %p74 = por %p72, %p73
      %p75 = scmp.ne.s32.totalorder %s67, %s70
      %p76 = scmp.eq.s32.totalorder %s31, 0
      %p77 = por %p75, %p76
      %p78 = scmp.ne.s32.totalorder %s67, %s70
      %p79 = scmp.eq.s32.totalorder %s36, 1
      %p80 = por %p78, %p79
      %p81 = scmp.ne.s32.totalorder %s70, %s71
      %p82 = scmp.eq.s32.totalorder %s36, 0
      %p83 = por %p81, %p82
      %p84 = scmp.ne.s32.totalorder %s70, %s71
      %p85 = scmp.eq.s32.totalorder %s37, 1
      %p86 = por %p84, %p85
      %p88 = scmp.ne.s32.totalorder %s71, %s87
      %p89 = scmp.eq.s32.totalorder %s37, 0
      %p90 = por %p88, %p89
      %s91 = ssub.s32 %s31, %s38
      %p92 = scmp.eq.s32.totalorder %s91, 0
      %s94 = sadd.s32 %s93, 1
      %s95 = scalar_select %p92, %s93, %s94
      %p98 = pneg %p92
      %p99 = scmp.eq.s32.totalorder %s31, 1
      %p100 = por %p98, %p99
      %p101 = scmp.ne.s32.totalorder %s93, %s96
      %p102 = scmp.eq.s32.totalorder %s31, 0
      %p103 = por %p101, %p102
      %p104 = scmp.ne.s32.totalorder %s93, %s96
      %p105 = scmp.eq.s32.totalorder %s36, 1
      %p106 = por %p104, %p105
      %p107 = scmp.ne.s32.totalorder %s96, %s97
      %p108 = scmp.eq.s32.totalorder %s36, 0
      %p109 = por %p107, %p108
      %p110 = scmp.ne.s32.totalorder %s96, %s97
      %p111 = scmp.eq.s32.totalorder %s37, 1
      %p112 = por %p110, %p111
      %p114 = scmp.ne.s32.totalorder %s97, %s113
      %p115 = scmp.eq.s32.totalorder %s37, 0
      %p116 = por %p114, %p115
      %s118 = sadd.s32 %s117, 1
      %p121 = scmp.eq.s32.totalorder %s31, 1
      %p122 = scmp.ne.s32.totalorder %s117, %s119
      %p123 = scmp.eq.s32.totalorder %s31, 0
      %p124 = por %p122, %p123
      %p125 = scmp.ne.s32.totalorder %s117, %s119
      %p126 = scmp.eq.s32.totalorder %s36, 1
      %p127 = por %p125, %p126
      %p128 = scmp.ne.s32.totalorder %s119, %s120
      %p129 = scmp.eq.s32.totalorder %s36, 0
      %p130 = por %p128, %p129
      %p131 = scmp.ne.s32.totalorder %s119, %s120
      %p132 = scmp.eq.s32.totalorder %s37, 1
      %p133 = por %p131, %p132
      %p135 = scmp.ne.s32.totalorder %s120, %s134
      %p136 = scmp.eq.s32.totalorder %s37, 0
      %p137 = por %p135, %p136
      %s139 = sadd.s32 %s138, 1
      %p142 = scmp.eq.s32.totalorder %s31, 1
      %p143 = scmp.ne.s32.totalorder %s138, %s140
      %p144 = scmp.eq.s32.totalorder %s31, 0
      %p145 = por %p143, %p144
      %p146 = scmp.ne.s32.totalorder %s138, %s140
      %p147 = scmp.eq.s32.totalorder %s36, 1
      %p148 = por %p146, %p147
      %p149 = scmp.ne.s32.totalorder %s140, %s141
      %p150 = scmp.eq.s32.totalorder %s36, 0
      %p151 = por %p149, %p150
      %p152 = scmp.ne.s32.totalorder %s140, %s141
      %p153 = scmp.eq.s32.totalorder %s37, 1
      %p154 = por %p152, %p153
      %p156 = scmp.ne.s32.totalorder %s141, %s155
      %p157 = scmp.eq.s32.totalorder %s37, 0
      %p158 = por %p156, %p157
      %s160 = sadd.s32 %s159, 1
      %p163 = scmp.eq.s32.totalorder %s31, 1
      %p164 = scmp.ne.s32.totalorder %s159, %s161
      %p165 = scmp.eq.s32.totalorder %s31, 0
      %p166 = por %p164, %p165
      %p167 = scmp.ne.s32.totalorder %s159, %s161
      %p168 = scmp.eq.s32.totalorder %s36, 1
      %p169 = por %p167, %p168
      %p170 = scmp.ne.s32.totalorder %s161, %s162
      %p171 = scmp.eq.s32.totalorder %s36, 0
      %p172 = por %p170, %p171
      %p173 = scmp.ne.s32.totalorder %s161, %s162
      %p174 = scmp.eq.s32.totalorder %s37, 1
      %p175 = por %p173, %p174
      %p177 = scmp.ne.s32.totalorder %s162, %s176
      %p178 = scmp.eq.s32.totalorder %s37, 0
      %p179 = por %p177, %p178
      %s181 = sadd.s32 %s180, 1
      %p184 = scmp.eq.s32.totalorder %s31, 1
      %p185 = scmp.ne.s32.totalorder %s180, %s182
      %p186 = scmp.eq.s32.totalorder %s31, 0
      %p187 = por %p185, %p186
      %p188 = scmp.ne.s32.totalorder %s180, %s182
      %p189 = scmp.eq.s32.totalorder %s36, 1
      %p190 = por %p188, %p189
      %p191 = scmp.ne.s32.totalorder %s182, %s183
      %p192 = scmp.eq.s32.totalorder %s36, 0
      %p193 = por %p191, %p192
      %p194 = scmp.ne.s32.totalorder %s182, %s183
      %p195 = scmp.eq.s32.totalorder %s37, 1
      %p196 = por %p194, %p195
      %p198 = scmp.ne.s32.totalorder %s183, %s197
      %p199 = scmp.eq.s32.totalorder %s37, 0
      %p200 = por %p198, %p199
      %s202 = sadd.s32 %s201, 1
      %p205 = scmp.eq.s32.totalorder %s31, 1
      %p206 = scmp.ne.s32.totalorder %s201, %s203
      %p207 = scmp.eq.s32.totalorder %s31, 0
      %p208 = por %p206, %p207
      %p209 = scmp.ne.s32.totalorder %s201, %s203
      %p210 = scmp.eq.s32.totalorder %s36, 1
      %p211 = por %p209, %p210
      %p212 = scmp.ne.s32.totalorder %s203, %s204
      %p213 = scmp.eq.s32.totalorder %s36, 0
      %p214 = por %p212, %p213
      %p215 = scmp.ne.s32.totalorder %s203, %s204
      %p216 = scmp.eq.s32.totalorder %s37, 1
      %p217 = por %p215, %p216
      %p219 = scmp.ne.s32.totalorder %s204, %s218
      %p220 = scmp.eq.s32.totalorder %s37, 0
      %p221 = por %p219, %p220
      %s223 = sadd.s32 %s222, 1
      %p226 = scmp.eq.s32.totalorder %s31, 1
      %p227 = scmp.ne.s32.totalorder %s222, %s224
      %p228 = scmp.eq.s32.totalorder %s31, 0
      %p229 = por %p227, %p228
      %p230 = scmp.ne.s32.totalorder %s222, %s224
      %p231 = scmp.eq.s32.totalorder %s36, 1
      %p232 = por %p230, %p231
      %p233 = scmp.ne.s32.totalorder %s224, %s225
      %p234 = scmp.eq.s32.totalorder %s36, 0
      %p235 = por %p233, %p234
      %p236 = scmp.ne.s32.totalorder %s224, %s225
      %p237 = scmp.eq.s32.totalorder %s37, 1
      %p238 = por %p236, %p237
      %p240 = scmp.ne.s32.totalorder %s225, %s239
      %p241 = scmp.eq.s32.totalorder %s37, 0
      %p242 = por %p240, %p241
      %s244 = sadd.s32 %s243, 1
      %p247 = scmp.eq.s32.totalorder %s31, 1
      %p248 = scmp.ne.s32.totalorder %s243, %s245
      %p249 = scmp.eq.s32.totalorder %s31, 0
      %p250 = por %p248, %p249
      %p251 = scmp.ne.s32.totalorder %s243, %s245
      %p252 = scmp.eq.s32.totalorder %s36, 1
      %p253 = por %p251, %p252
      %p254 = scmp.ne.s32.totalorder %s245, %s246
      %p255 = scmp.eq.s32.totalorder %s36, 0
      %p256 = por %p254, %p255
      %p257 = scmp.ne.s32.totalorder %s245, %s246
      %p258 = scmp.eq.s32.totalorder %s37, 1
      %p259 = por %p257, %p258
      %p261 = scmp.ne.s32.totalorder %s246, %s260
      %p262 = scmp.eq.s32.totalorder %s37, 0
      %p263 = por %p261, %p262
      %s265 = sadd.s32 %s264, 1
      %p268 = scmp.eq.s32.totalorder %s31, 1
      %p269 = scmp.ne.s32.totalorder %s264, %s266
      %p270 = scmp.eq.s32.totalorder %s31, 0
      %p271 = por %p269, %p270
      %p272 = scmp.ne.s32.totalorder %s264, %s266
      %p273 = scmp.eq.s32.totalorder %s36, 1
      %p274 = por %p272, %p273
      %p275 = scmp.ne.s32.totalorder %s266, %s267
      %p276 = scmp.eq.s32.totalorder %s36, 0
      %p277 = por %p275, %p276
      %p278 = scmp.ne.s32.totalorder %s266, %s267
      %p279 = scmp.eq.s32.totalorder %s37, 1
      %p280 = por %p278, %p279
      %p282 = scmp.ne.s32.totalorder %s267, %s281
      %p283 = scmp.eq.s32.totalorder %s37, 0
      %p284 = por %p282, %p283
      %s286 = sadd.s32 %s285, 1
      %p289 = scmp.eq.s32.totalorder %s31, 1
      %p290 = scmp.ne.s32.totalorder %s285, %s287
      %p291 = scmp.eq.s32.totalorder %s31, 0
      %p292 = por %p290, %p291
      %p293 = scmp.ne.s32.totalorder %s285, %s287
      %p294 = scmp.eq.s32.totalorder %s36, 1
      %p295 = por %p293, %p294
      %p296 = scmp.ne.s32.totalorder %s287, %s288
      %p297 = scmp.eq.s32.totalorder %s36, 0
      %p298 = por %p296, %p297
      %p299 = scmp.ne.s32.totalorder %s287, %s288
      %p300 = scmp.eq.s32.totalorder %s37, 1
      %p301 = por %p299, %p300
      %p303 = scmp.ne.s32.totalorder %s288, %s302
      %p304 = scmp.eq.s32.totalorder %s37, 0
      %p305 = por %p303, %p304
      %s307 = sadd.s32 %s306, 1
      %p310 = scmp.eq.s32.totalorder %s31, 1
      %p311 = scmp.ne.s32.totalorder %s306, %s308
      %p312 = scmp.eq.s32.totalorder %s31, 0
      %p313 = por %p311, %p312
      %p314 = scmp.ne.s32.totalorder %s306, %s308
      %p315 = scmp.eq.s32.totalorder %s36, 1
      %p316 = por %p314, %p315
      %p317 = scmp.ne.s32.totalorder %s308, %s309
      %p318 = scmp.eq.s32.totalorder %s36, 0
      %p319 = por %p317, %p318
      %p320 = scmp.ne.s32.totalorder %s308, %s309
      %p321 = scmp.eq.s32.totalorder %s37, 1
      %p322 = por %p320, %p321
      %p324 = scmp.ne.s32.totalorder %s309, %s323
      %p325 = scmp.eq.s32.totalorder %s37, 0
      %p326 = por %p324, %p325
      %s328 = sadd.s32 %s327, 1
      %p331 = scmp.eq.s32.totalorder %s31, 1
      %p332 = scmp.ne.s32.totalorder %s327, %s329
      %p333 = scmp.eq.s32.totalorder %s31, 0
      %p334 = por %p332, %p333
      %p335 = scmp.ne.s32.totalorder %s327, %s329
      %p336 = scmp.eq.s32.totalorder %s36, 1
      %p337 = por %p335, %p336
      %p338 = scmp.ne.s32.totalorder %s329, %s330
      %p339 = scmp.eq.s32.totalorder %s36, 0
      %p340 = por %p338, %p339
      %p341 = scmp.ne.s32.totalorder %s329, %s330
      %p342 = scmp.eq.s32.totalorder %s37, 1
      %p343 = por %p341, %p342
      %p345 = scmp.ne.s32.totalorder %s330, %s344
      %p346 = scmp.eq.s32.totalorder %s37, 0
      %p347 = por %p345, %p346
      %s349 = sadd.s32 %s348, 1
      %p352 = scmp.eq.s32.totalorder %s31, 1
      %p353 = scmp.ne.s32.totalorder %s348, %s350
      %p354 = scmp.eq.s32.totalorder %s31, 0
      %p355 = por %p353, %p354
      %p356 = scmp.ne.s32.totalorder %s348, %s350
      %p357 = scmp.eq.s32.totalorder %s36, 1
      %p358 = por %p356, %p357
      %p359 = scmp.ne.s32.totalorder %s350, %s351
      %p360 = scmp.eq.s32.totalorder %s36, 0
      %p361 = por %p359, %p360
      %p362 = scmp.ne.s32.totalorder %s350, %s351
      %p363 = scmp.eq.s32.totalorder %s37, 1
      %p364 = por %p362, %p363
      %p366 = scmp.ne.s32.totalorder %s351, %s365
      %p367 = scmp.eq.s32.totalorder %s37, 0
      %p368 = por %p366, %p367
      %s370 = sadd.s32 %s369, 1
      %p373 = scmp.eq.s32.totalorder %s31, 1
      %p374 = scmp.ne.s32.totalorder %s369, %s371
      %p375 = scmp.eq.s32.totalorder %s31, 0
      %p376 = por %p374, %p375
      %p377 = scmp.ne.s32.totalorder %s369, %s371
      %p378 = scmp.eq.s32.totalorder %s36, 1
      %p379 = por %p377, %p378
      %p380 = scmp.ne.s32.totalorder %s371, %s372
      %p381 = scmp.eq.s32.totalorder %s36, 0
      %p382 = por %p380, %p381
      %p383 = scmp.ne.s32.totalorder %s371, %s372
      %p384 = scmp.eq.s32.totalorder %s37, 1
      %p385 = por %p383, %p384
      %p387 = scmp.ne.s32.totalorder %s372, %s386
      %p388 = scmp.eq.s32.totalorder %s37, 0
      %p389 = por %p387, %p388
      %s391 = sadd.s32 %s390, 1
      %p394 = scmp.eq.s32.totalorder %s31, 1
      %p395 = scmp.ne.s32.totalorder %s390, %s392
      %p396 = scmp.eq.s32.totalorder %s31, 0
      %p397 = por %p395, %p396
      %p398 = scmp.ne.s32.totalorder %s390, %s392
      %p399 = scmp.eq.s32.totalorder %s36, 1
      %p400 = por %p398, %p399
      %p401 = scmp.ne.s32.totalorder %s392, %s393
      %p402 = scmp.eq.s32.totalorder %s36, 0
      %p403 = por %p401, %p402
      %p404 = scmp.ne.s32.totalorder %s392, %s393
      %p405 = scmp.eq.s32.totalorder %s37, 1
      %p406 = por %p404, %p405
      %p408 = scmp.ne.s32.totalorder %s393, %s407
      %p409 = scmp.eq.s32.totalorder %s37, 0
      %p410 = por %p408, %p409
      %s412 = sadd.s32 %s411, 1
      %p415 = scmp.eq.s32.totalorder %s31, 1
      %p416 = scmp.ne.s32.totalorder %s411, %s413
      %p417 = scmp.eq.s32.totalorder %s31, 0
      %p418 = por %p416, %p417
      %p419 = scmp.ne.s32.totalorder %s411, %s413
      %p420 = scmp.eq.s32.totalorder %s36, 1
      %p421 = por %p419, %p420
      %p422 = scmp.ne.s32.totalorder %s413, %s414
      %p423 = scmp.eq.s32.totalorder %s36, 0
      %p424 = por %p422, %p423
      %p425 = scmp.ne.s32.totalorder %s413, %s414
      %p426 = scmp.eq.s32.totalorder %s37, 1
      %p427 = por %p425, %p426
      %p429 = scmp.ne.s32.totalorder %s414, %s428
      %p430 = scmp.eq.s32.totalorder %s37, 0
      %p431 = por %p429, %p430
      %s433 = sadd.s32 %s432, 1
      %p436 = scmp.eq.s32.totalorder %s31, 1
      %p437 = scmp.ne.s32.totalorder %s432, %s434
      %p438 = scmp.eq.s32.totalorder %s31, 0
      %p439 = por %p437, %p438
      %p440 = scmp.ne.s32.totalorder %s432, %s434
      %p441 = scmp.eq.s32.totalorder %s36, 1
      %p442 = por %p440, %p441
      %p443 = scmp.ne.s32.totalorder %s434, %s435
      %p444 = scmp.eq.s32.totalorder %s36, 0
      %p445 = por %p443, %p444
      %p446 = scmp.ne.s32.totalorder %s434, %s435
      %p447 = scmp.eq.s32.totalorder %s37, 1
      %p448 = por %p446, %p447
      %p450 = scmp.ne.s32.totalorder %s435, %s449
      %p451 = scmp.eq.s32.totalorder %s37, 0
      %p452 = por %p450, %p451
      %p453 = scmp.le.s32.totalorder 1, %s31
      %p454 = scmp.lt.s32.totalorder %s31, 3
      %p455 = pnand %p453, %p454
      %p456 = pneg %p455
      // Predicated region
      $region9: #{tpu_custom_call.1} parent=5 // pred_check
        _
      $region10: #{tpu_custom_call.1} parent=5 // pred_check_branch
        %458 = sbr.rel (%p455) target = $region12
      $region11: #{tpu_custom_call.1} parent=5 // pred_region
        %s459 = ssub.s32 %s31, 1
        // Predicated region
        $region13: #{tpu_custom_call.1} parent=11 // pred_check
          %p460 = pneg %p130
        $region14: #{tpu_custom_call.1} parent=11 // pred_check_branch
          %462 = sbr.rel (%p460) target = $region16
        $region15: #{tpu_custom_call.1} parent=11 // pred_region
          _
        $region16: #{tpu_custom_call.1} parent=11 // pred_fallthru
          _
        // Predicated region
        $region17: #{tpu_custom_call.1} parent=11 // pred_check
          %p463 = pneg %p151
        $region18: #{tpu_custom_call.1} parent=11 // pred_check_branch
          %465 = sbr.rel (%p463) target = $region20
        $region19: #{tpu_custom_call.1} parent=11 // pred_region
          _
        $region20: #{tpu_custom_call.1} parent=11 // pred_fallthru
          _
        // Predicated region
        $region21: #{tpu_custom_call.1} parent=11 // pred_check
          %p466 = pneg %p172
        $region22: #{tpu_custom_call.1} parent=11 // pred_check_branch
          %468 = sbr.rel (%p466) target = $region24
        $region23: #{tpu_custom_call.1} parent=11 // pred_region
          _
        $region24: #{tpu_custom_call.1} parent=11 // pred_fallthru
          _
        // Predicated region
        $region25: #{tpu_custom_call.1} parent=11 // pred_check
          %p469 = pneg %p193
        $region26: #{tpu_custom_call.1} parent=11 // pred_check_branch
          %471 = sbr.rel (%p469) target = $region28
        $region27: #{tpu_custom_call.1} parent=11 // pred_region
          _
        $region28: #{tpu_custom_call.1} parent=11 // pred_fallthru
          _
        // Predicated region
        $region29: #{tpu_custom_call.1} parent=11 // pred_check
          %p472 = pneg %p214
        $region30: #{tpu_custom_call.1} parent=11 // pred_check_branch
          %474 = sbr.rel (%p472) target = $region32
        $region31: #{tpu_custom_call.1} parent=11 // pred_region
          _
        $region32: #{tpu_custom_call.1} parent=11 // pred_fallthru
          _
        // Predicated region
        $region33: #{tpu_custom_call.1} parent=11 // pred_check
          %p475 = pneg %p235
        $region34: #{tpu_custom_call.1} parent=11 // pred_check_branch
          %477 = sbr.rel (%p475) target = $region36
        $region35: #{tpu_custom_call.1} parent=11 // pred_region
          _
        $region36: #{tpu_custom_call.1} parent=11 // pred_fallthru
          _
        // Predicated region
        $region37: #{tpu_custom_call.1} parent=11 // pred_check
          %p478 = pneg %p256
        $region38: #{tpu_custom_call.1} parent=11 // pred_check_branch
          %480 = sbr.rel (%p478) target = $region40
        $region39: #{tpu_custom_call.1} parent=11 // pred_region
          _
        $region40: #{tpu_custom_call.1} parent=11 // pred_fallthru
          _
        // Predicated region
        $region41: #{tpu_custom_call.1} parent=11 // pred_check
          %p481 = pneg %p277
        $region42: #{tpu_custom_call.1} parent=11 // pred_check_branch
          %483 = sbr.rel (%p481) target = $region44
        $region43: #{tpu_custom_call.1} parent=11 // pred_region
          _
        $region44: #{tpu_custom_call.1} parent=11 // pred_fallthru
          _
        // Predicated region
        $region45: #{tpu_custom_call.1} parent=11 // pred_check
          %p484 = pneg %p298
        $region46: #{tpu_custom_call.1} parent=11 // pred_check_branch
          %486 = sbr.rel (%p484) target = $region48
        $region47: #{tpu_custom_call.1} parent=11 // pred_region
          _
        $region48: #{tpu_custom_call.1} parent=11 // pred_fallthru
          _
        // Predicated region
        $region49: #{tpu_custom_call.1} parent=11 // pred_check
          %p487 = pneg %p319
        $region50: #{tpu_custom_call.1} parent=11 // pred_check_branch
          %489 = sbr.rel (%p487) target = $region52
        $region51: #{tpu_custom_call.1} parent=11 // pred_region
          _
        $region52: #{tpu_custom_call.1} parent=11 // pred_fallthru
          _
        // Predicated region
        $region53: #{tpu_custom_call.1} parent=11 // pred_check
          %p490 = pneg %p340
        $region54: #{tpu_custom_call.1} parent=11 // pred_check_branch
          %492 = sbr.rel (%p490) target = $region56
        $region55: #{tpu_custom_call.1} parent=11 // pred_region
          %494 = vsyncadd [#allocation7], 0
          %s495 = sshll.u32 %s13, 4
          %s496 = int_to_ptr.hbm [resolvable:$true] %s495
          %s497 = sshll.u32 [#allocation6], 4
          %s498 = int_to_ptr.vmem [resolvable:$true] %s497
          %503 = dma.hbm_to_vmem [thread:$0]  %s496, 1024, %s498, [#allocation7], 64, 64, 4
        $region56: #{tpu_custom_call.1} parent=11 // pred_fallthru
          _
        // Predicated region
        $region57: #{tpu_custom_call.1} parent=11 // pred_check
          %p504 = pneg %p361
        $region58: #{tpu_custom_call.1} parent=11 // pred_check_branch
          %506 = sbr.rel (%p504) target = $region60
        $region59: #{tpu_custom_call.1} parent=11 // pred_region
          _
        $region60: #{tpu_custom_call.1} parent=11 // pred_fallthru
          _
        // Predicated region
        $region61: #{tpu_custom_call.1} parent=11 // pred_check
          %p507 = pneg %p382
        $region62: #{tpu_custom_call.1} parent=11 // pred_check_branch
          %509 = sbr.rel (%p507) target = $region64
        $region63: #{tpu_custom_call.1} parent=11 // pred_region
          %511 = vsyncadd [#allocation7], 0
          %s512 = sshll.u32 %s15, 4
          %s513 = int_to_ptr.hbm [resolvable:$true] %s512
          %s514 = sshll.u32 [#allocation8], 4
          %s515 = int_to_ptr.vmem [resolvable:$true] %s514
          %520 = dma.hbm_to_vmem [thread:$0]  %s513, 1024, %s515, [#allocation7], 64, 64, 4
        $region64: #{tpu_custom_call.1} parent=11 // pred_fallthru
          _
        // Predicated region
        $region65: #{tpu_custom_call.1} parent=11 // pred_check
          %p521 = pneg %p403
        $region66: #{tpu_custom_call.1} parent=11 // pred_check_branch
          %523 = sbr.rel (%p521) target = $region68
        $region67: #{tpu_custom_call.1} parent=11 // pred_region
          _
        $region68: #{tpu_custom_call.1} parent=11 // pred_fallthru
          _
      $region12: #{tpu_custom_call.1} parent=5 // pred_fallthru
        _
      %p524 = scmp.lt.s32.totalorder %s31, 2
      // Predicated region
      $region69: #{tpu_custom_call.1} parent=5 // pred_check
        %p525 = pneg %p524
      $region70: #{tpu_custom_call.1} parent=5 // pred_check_branch
        %527 = sbr.rel (%p525) target = $region72
      $region71: #{tpu_custom_call.1} parent=5 // pred_region
        // Predicated region
        $region73: #{tpu_custom_call.1} parent=71 // pred_check
          %p528 = pneg %p51
        $region74: #{tpu_custom_call.1} parent=71 // pred_check_branch
          %530 = sbr.rel (%p528) target = $region76
        $region75: #{tpu_custom_call.1} parent=71 // pred_region
          %s531 = sand.u32 %s41, 1
          %s532 = scalar_lea.sflag [#allocation4], %s531
          %s533 = sand.u32 %s41, 1
          %s534 = smul.addr %s533, 16
          %s535 = scalar_lea.vmem [#allocation3], %s534
          %s536 = smul.u32 4, %s31
          %538 = vsyncadd %s532, 0
          %s539 = smul.addr %s536, 4
          %s540 = scalar_lea.hbm %s0, %s539
          %s542 = sshll.u32 %s540, 4
          %s543 = int_to_ptr.hbm [resolvable:$true] %s542
          %s544 = sshll.u32 %s535, 4
          %s545 = int_to_ptr.vmem [resolvable:$true] %s544
          %547 = dma.hbm_to_vmem [thread:$0]  %s543, 256, %s545, %s532
        $region76: #{tpu_custom_call.1} parent=71 // pred_fallthru
          _
        // Predicated region
        $region77: #{tpu_custom_call.1} parent=71 // pred_check
          %p548 = pneg %p77
        $region78: #{tpu_custom_call.1} parent=71 // pred_check_branch
          %550 = sbr.rel (%p548) target = $region80
        $region79: #{tpu_custom_call.1} parent=71 // pred_region
          %s551 = smul.u32 4, %s31
          %p552 = scmp.lt.s32.totalorder %s551, 7
          %s553 = scalar_select %p552, %s551, 7
          %s554 = scalar_lea.vmem %s1, %s553
          %s555 = smul.u32 4, %s31
        $region80: #{tpu_custom_call.1} parent=71 // pred_fallthru
          _
        // Predicated region
        $region81: #{tpu_custom_call.1} parent=71 // pred_check
          %p556 = pneg %p103
        $region82: #{tpu_custom_call.1} parent=71 // pred_check_branch
          %558 = sbr.rel (%p556) target = $region84
        $region83: #{tpu_custom_call.1} parent=71 // pred_region
          %s559 = smul.u32 4, %s31
          %p560 = scmp.lt.s32.totalorder %s559, 7
          %s561 = scalar_select %p560, %s559, 7
          %s562 = scalar_lea.vmem %s2, %s561
          %s563 = smul.u32 4, %s31
        $region84: #{tpu_custom_call.1} parent=71 // pred_fallthru
          _
      $region72: #{tpu_custom_call.1} parent=5 // pred_fallthru
        _
      %p564 = scmp.le.s32.totalorder 1, %s31
      %p565 = scmp.lt.s32.totalorder %s31, 3
      %p566 = pnand %p564, %p565
      %p567 = pneg %p566
      // Predicated region
      $region85: #{tpu_custom_call.1} parent=5 // pred_check
        _
      $region86: #{tpu_custom_call.1} parent=5 // pred_check_branch
        %569 = sbr.rel (%p566) target = $region88
      $region87: #{tpu_custom_call.1} parent=5 // pred_region
        %s570 = ssub.s32 %s31, 1
        %s571 = sand.u32 %s44, 1
        %s572 = scalar_lea.sflag [#allocation4], %s571
        %s573 = sand.u32 %s44, 1
        %s574 = smul.addr %s573, 16
        %s575 = scalar_lea.vmem [#allocation3], %s574
        // Predicated region
        $region89: #{tpu_custom_call.1} parent=87 // pred_check
          %p576 = pneg %p57
        $region90: #{tpu_custom_call.1} parent=87 // pred_check_branch
          %578 = sbr.rel (%p576) target = $region92
        $region91: #{tpu_custom_call.1} parent=87 // pred_region
          %580 = dma.done %s572, 256
        $region92: #{tpu_custom_call.1} parent=87 // pred_fallthru
          _
        // Predicated region
        $region93: #{tpu_custom_call.1} parent=87 // pred_check
          %p581 = pneg %p340
        $region94: #{tpu_custom_call.1} parent=87 // pred_check_branch
          %583 = sbr.rel (%p581) target = $region96
        $region95: #{tpu_custom_call.1} parent=87 // pred_region
          %585 = dma.done [#allocation7], 1024
        $region96: #{tpu_custom_call.1} parent=87 // pred_fallthru
          _
        // Predicated region
        $region97: #{tpu_custom_call.1} parent=87 // pred_check
          %p586 = pneg %p382
        $region98: #{tpu_custom_call.1} parent=87 // pred_check_branch
          %588 = sbr.rel (%p586) target = $region100
        $region99: #{tpu_custom_call.1} parent=87 // pred_region
          %590 = dma.done [#allocation7], 1024
        $region100: #{tpu_custom_call.1} parent=87 // pred_fallthru
          _
        %s591 = sand.u32 %s44, 1
        %s592 = scalar_lea.sflag [#allocation4], %s591
        %s593 = sand.u32 %s44, 1
        %s594 = smul.addr %s593, 16
        %s595 = scalar_lea.vmem [#allocation3], %s594
        %p596 = pneg %p57
        %p597 = pneg %p54
        %s598 = smul.u32 4, %s36
        %p599 = scmp.lt.s32.totalorder %s598, 7
        %s600 = scalar_select %p599, %s598, 7
        %s601 = scalar_lea.vmem %s1, %s600
        %p602 = pneg %p83
        %p603 = pneg %p80
        %s604 = smul.u32 4, %s36
        %p605 = scmp.lt.s32.totalorder %s604, 7
        %s606 = scalar_select %p605, %s604, 7
        %s607 = scalar_lea.vmem %s2, %s606
        %p608 = pneg %p109
        %p609 = pneg %p106
        %p610 = pneg %p130
        %p611 = pneg %p127
        %p612 = pneg %p151
        %p613 = pneg %p148
        %p614 = pneg %p172
        %p615 = pneg %p169
        %p616 = pneg %p193
        %p617 = pneg %p190
        %p618 = pneg %p214
        %p619 = pneg %p211
        %p620 = pneg %p235
        %p621 = pneg %p232
        %p622 = pneg %p256
        %p623 = pneg %p253
        %p624 = pneg %p277
        %p625 = pneg %p274
        %p626 = pneg %p298
        %p627 = pneg %p295
        %p628 = pneg %p319
        %p629 = pneg %p316
        %p630 = pneg %p340
        %p631 = pneg %p337
        %p632 = pneg %p361
        %p633 = pneg %p358
        %p634 = pneg %p382
        %p635 = pneg %p379
        %p636 = pneg %p403
        %p637 = pneg %p400
        %p638 = pneg %p424
        %p639 = pneg %p421
        %p640 = pneg %p445
        %p641 = pneg %p442
        %s642 = smul.u32 4, %s36
        %s643 = smul.u32 4, %s36
        %p644 = scmp.lt.s32.totalorder %s643, 7
        %s645 = scalar_select %p644, %s643, 7
        %s646 = scalar_lea.vmem %s1, %s645
        %s647 = smul.u32 4, %s36
        %s648 = smul.u32 4, %s36
        %p649 = scmp.lt.s32.totalorder %s648, 7
        %s650 = scalar_select %p649, %s648, 7
        %s651 = scalar_lea.vmem %s2, %s650
        %s652 = smul.u32 4, %s36
        %p654 = scmp.eq.s32.totalorder %s36, 0
        // Predicated region
        $region101: #{tpu_custom_call.1} parent=87 // pred_check
          %p655 = pneg %p654
        $region102: #{tpu_custom_call.1} parent=87 // pred_check_branch
          %657 = sbr.rel (%p655) target = $region104
        $region103: #{tpu_custom_call.1} parent=87 // pred_region
          %658 = vst [vmem:[#allocation2] sm:$0xff] 0.0
          %659 = vst [vmem:[#allocation2 + $0x8] sm:$0xff] 0.0
        $region104: #{tpu_custom_call.1} parent=87 // pred_fallthru
          _
        %v660 = vld [vmem:[%s3] sm:$0xff]
        %v661 = vld [vmem:[%s3 + $0x8] sm:$0xff]
        %v662 = vld [vmem:[%s575] sm:$0x77]
        %v663 = vld [vmem:[%s575 + $0x8] sm:$0x77]
        %666 = vst [vmem:[#allocation1] ss:$2 sm:$0xff] %v662
        %s667 = scalar_lea.vmem [#allocation1], 16
        %668 = vst [vmem:[%s667] ss:$2 sm:$0xff] %v663
        %v669 = vld.sshfl [vmem:[#allocation1] sm:$0xff pattern:$0x75316420]
        %v670 = vld.sshfl [vmem:[#allocation1 + $0x8] sm:$0xff pattern:$0x75316420]
        %v671 = vld.sshfl [vmem:[#allocation1 + $0x10] sm:$0xff pattern:$0x75316420]
        %v672 = vld.sshfl [vmem:[#allocation1 + $0x18] sm:$0xff pattern:$0x75316420]
        %v677 = vpack.c.bf16 %v669, %v669
        %v678 = vpack.c.bf16 %v670, %v670
        %v679 = vpack.c.bf16 %v671, %v671
        %v680 = vpack.c.bf16 %v672, %v672
        %v681 = vld [vmem:[%s5] sm:$0xf]
        %v682 = vld [vmem:[%s5 + $0x4] sm:$0xf]
        %v683 = vld [vmem:[%s5 + $0x8] sm:$0xf]
        %v684 = vld [vmem:[%s5 + $0xc] sm:$0xf]
        %v685 = vld [vmem:[%s5 + $0x10] sm:$0xf]
        %v686 = vld [vmem:[%s5 + $0x14] sm:$0xf]
        %v687 = vld [vmem:[%s5 + $0x18] sm:$0xf]
        %v688 = vld [vmem:[%s5 + $0x1c] sm:$0xf]
        %v689 = vld [vmem:[%s5 + $0x20] sm:$0xf]
        %v690 = vld [vmem:[%s5 + $0x24] sm:$0xf]
        %v691 = vld [vmem:[%s5 + $0x28] sm:$0xf]
        %v692 = vld [vmem:[%s5 + $0x2c] sm:$0xf]
        %v693 = vld [vmem:[%s5 + $0x30] sm:$0xf]
        %v694 = vld [vmem:[%s5 + $0x34] sm:$0xf]
        %v695 = vld [vmem:[%s5 + $0x38] sm:$0xf]
        %v696 = vld [vmem:[%s5 + $0x3c] sm:$0xf]
        %v697 = vld [vmem:[%s6] sm:$0xff]
        %v698 = vld [vmem:[%s6 + $0x8] sm:$0xff]
        %v699 = vld [vmem:[%s6 + $0x10] sm:$0xff]
        %v700 = vld [vmem:[%s6 + $0x18] sm:$0xff]
        %v701 = vld [vmem:[%s6 + $0x20] sm:$0xff]
        %v702 = vld [vmem:[%s6 + $0x28] sm:$0xff]
        %v703 = vld [vmem:[%s6 + $0x30] sm:$0xff]
        %v704 = vld [vmem:[%s6 + $0x38] sm:$0xff]
        %v705 = vld [vmem:[%s6 + $0x40] sm:$0xff]
        %v706 = vld [vmem:[%s6 + $0x48] sm:$0xff]
        %v707 = vld [vmem:[%s6 + $0x50] sm:$0xff]
        %v708 = vld [vmem:[%s6 + $0x58] sm:$0xff]
        %v709 = vld [vmem:[%s6 + $0x60] sm:$0xff]
        %v710 = vld [vmem:[%s6 + $0x68] sm:$0xff]
        %v711 = vld [vmem:[%s6 + $0x70] sm:$0xff]
        %v712 = vld [vmem:[%s6 + $0x78] sm:$0xff]
        %714 = vset.pattern.permute.xlu0 0
        %715 = vperm.xlu0 %714, %v697
        %v716 = vpop.permute.xlu0 %715
        %719 = vset.pattern.permute.xlu0 0
        %720 = vperm.xlu0 %719, %v698
        %v721 = vpop.permute.xlu0 %720
        %724 = vset.pattern.permute.xlu0 0
        %725 = vperm.xlu0 %724, %v699
        %v726 = vpop.permute.xlu0 %725
        %729 = vset.pattern.permute.xlu0 0
        %730 = vperm.xlu0 %729, %v700
        %v731 = vpop.permute.xlu0 %730
        %734 = vset.pattern.permute.xlu0 0
        %735 = vperm.xlu0 %734, %v701
        %v736 = vpop.permute.xlu0 %735
        %739 = vset.pattern.permute.xlu0 0
        %740 = vperm.xlu0 %739, %v702
        %v741 = vpop.permute.xlu0 %740
        %744 = vset.pattern.permute.xlu0 0
        %745 = vperm.xlu0 %744, %v703
        %v746 = vpop.permute.xlu0 %745
        %749 = vset.pattern.permute.xlu0 0
        %750 = vperm.xlu0 %749, %v704
        %v751 = vpop.permute.xlu0 %750
        %754 = vset.pattern.permute.xlu0 0
        %755 = vperm.xlu0 %754, %v705
        %v756 = vpop.permute.xlu0 %755
        %759 = vset.pattern.permute.xlu0 0
        %760 = vperm.xlu0 %759, %v706
        %v761 = vpop.permute.xlu0 %760
        %764 = vset.pattern.permute.xlu0 0
        %765 = vperm.xlu0 %764, %v707
        %v766 = vpop.permute.xlu0 %765
        %769 = vset.pattern.permute.xlu0 0
        %770 = vperm.xlu0 %769, %v708
        %v771 = vpop.permute.xlu0 %770
        %774 = vset.pattern.permute.xlu0 0
        %775 = vperm.xlu0 %774, %v709
        %v776 = vpop.permute.xlu0 %775
        %779 = vset.pattern.permute.xlu0 0
        %780 = vperm.xlu0 %779, %v710
        %v781 = vpop.permute.xlu0 %780
        %784 = vset.pattern.permute.xlu0 0
        %785 = vperm.xlu0 %784, %v711
        %v786 = vpop.permute.xlu0 %785
        %789 = vset.pattern.permute.xlu0 0
        %790 = vperm.xlu0 %789, %v712
        %v791 = vpop.permute.xlu0 %790
        %v809 = vunpack.c.l.b16 %v681
        %v810 = vunpack.c.l.b16 %v682
        %v811 = vunpack.c.l.b16 %v683
        %v812 = vunpack.c.l.b16 %v684
        %v813 = vunpack.c.l.b16 %v685
        %v814 = vunpack.c.l.b16 %v686
        %v815 = vunpack.c.l.b16 %v687
        %v816 = vunpack.c.l.b16 %v688
        %v817 = vunpack.c.l.b16 %v689
        %v818 = vunpack.c.l.b16 %v690
        %v819 = vunpack.c.l.b16 %v691
        %v820 = vunpack.c.l.b16 %v692
        %v821 = vunpack.c.l.b16 %v693
        %v822 = vunpack.c.l.b16 %v694
        %v823 = vunpack.c.l.b16 %v695
        %v824 = vunpack.c.l.b16 %v696
        %v825 = vpack.c.b16 %v810, %v809
        %v826 = vpack.c.b16 %v812, %v811
        %v827 = vpack.c.b16 %v814, %v813
        %v828 = vpack.c.b16 %v816, %v815
        %v829 = vpack.c.b16 %v818, %v817
        %v830 = vpack.c.b16 %v820, %v819
        %v831 = vpack.c.b16 %v822, %v821
        %v832 = vpack.c.b16 %v824, %v823
        %vm833 = vcmask 23552
        %v835 = vsel %vm833, %v825, 0
        %v838 = vsel %vm833, %v826, 0
        %v841 = vsel %vm833, %v827, 0
        %v844 = vsel %vm833, %v828, 0
        %v847 = vsel %vm833, %v829, 0
        %v850 = vsel %vm833, %v830, 0
        %v853 = vsel %vm833, %v831, 0
        %v856 = vsel %vm833, %v832, 0
        %vm858 = vcmask 1040384
        %vm859 = vcmask 1041408
        %v860 = vsel %vm858, 4294967295, 65535
        %v861 = vsel %vm859, %v860, 0
        %v863 = vand.u32 %v677, %v861
        %v866 = vand.u32 %v678, %v861
        %v869 = vand.u32 %v679, %v861
        %v872 = vand.u32 %v680, %v861
        %874 = vmatpush.bf16.msra.mxu0 0
        %875 = vmatpush.bf16.msra.mxu0 0
        %876 = vmatpush.bf16.msra.mxu0 0
        %877 = vmatpush.bf16.msra.mxu0 0
        %878 = vmatpush.bf16.msra.mxu0 0
        %879 = vmatpush.bf16.msra.mxu0 0
        %880 = vmatpush.bf16.msra.mxu0 0
        %881 = vmatpush.bf16.msra.mxu0 %v863
        %882 = vmatmul.bf16.gmra.mxu0 %v835
        %v883 = vpop.f32.mrf.mxu0
        %v884 = vadd.f32 %v716, %v883
        %v885 = vpop.f32.mrf.mxu0
        %v886 = vadd.f32 %v721, %v885
        %887 = vmatmul.bf16.gmra.mxu0 %v838
        %v888 = vpop.f32.mrf.mxu0
        %v889 = vadd.f32 %v726, %v888
        %v890 = vpop.f32.mrf.mxu0
        %v891 = vadd.f32 %v731, %v890
        %892 = vmatmul.bf16.gmra.mxu0 %v841
        %v893 = vpop.f32.mrf.mxu0
        %v894 = vadd.f32 %v736, %v893
        %v895 = vpop.f32.mrf.mxu0
        %v896 = vadd.f32 %v741, %v895
        %897 = vmatmul.bf16.gmra.mxu0 %v844
        %v898 = vpop.f32.mrf.mxu0
        %v899 = vadd.f32 %v746, %v898
        %v900 = vpop.f32.mrf.mxu0
        %v901 = vadd.f32 %v751, %v900
        %902 = vmatmul.bf16.gmra.mxu0 %v847
        %v903 = vpop.f32.mrf.mxu0
        %v904 = vadd.f32 %v756, %v903
        %v905 = vpop.f32.mrf.mxu0
        %v906 = vadd.f32 %v761, %v905
        %907 = vmatmul.bf16.gmra.mxu0 %v850
        %v908 = vpop.f32.mrf.mxu0
        %v909 = vadd.f32 %v766, %v908
        %v910 = vpop.f32.mrf.mxu0
        %v911 = vadd.f32 %v771, %v910
        %912 = vmatmul.bf16.gmra.mxu0 %v853
        %v913 = vpop.f32.mrf.mxu0
        %v914 = vadd.f32 %v776, %v913
        %v915 = vpop.f32.mrf.mxu0
        %v916 = vadd.f32 %v781, %v915
        %917 = vmatmul.bf16.gmra.mxu0 %v856
        %v918 = vpop.f32.mrf.mxu0
        %v919 = vadd.f32 %v786, %v918
        %v920 = vpop.f32.mrf.mxu0
        %v921 = vadd.f32 %v791, %v920
        %922 = vdwg.mxu0
        %923 = vmatpush.bf16.msra.mxu0 0
        %924 = vmatpush.bf16.msra.mxu0 0
        %925 = vmatpush.bf16.msra.mxu0 0
        %926 = vmatpush.bf16.msra.mxu0 0
        %927 = vmatpush.bf16.msra.mxu0 0
        %928 = vmatpush.bf16.msra.mxu0 0
        %929 = vmatpush.bf16.msra.mxu0 0
        %930 = vmatpush.bf16.msra.mxu0 %v866
        %931 = vmatmul.bf16.gmra.mxu0 %v835
        %v932 = vpop.f32.mrf.mxu0
        %v933 = vadd.f32 %v716, %v932
        %v934 = vpop.f32.mrf.mxu0
        %v935 = vadd.f32 %v721, %v934
        %936 = vmatmul.bf16.gmra.mxu0 %v838
        %v937 = vpop.f32.mrf.mxu0
        %v938 = vadd.f32 %v726, %v937
        %v939 = vpop.f32.mrf.mxu0
        %v940 = vadd.f32 %v731, %v939
        %941 = vmatmul.bf16.gmra.mxu0 %v841
        %v942 = vpop.f32.mrf.mxu0
        %v943 = vadd.f32 %v736, %v942
        %v944 = vpop.f32.mrf.mxu0
        %v945 = vadd.f32 %v741, %v944
        %946 = vmatmul.bf16.gmra.mxu0 %v844
        %v947 = vpop.f32.mrf.mxu0
        %v948 = vadd.f32 %v746, %v947
        %v949 = vpop.f32.mrf.mxu0
        %v950 = vadd.f32 %v751, %v949
        %951 = vmatmul.bf16.gmra.mxu0 %v847
        %v952 = vpop.f32.mrf.mxu0
        %v953 = vadd.f32 %v756, %v952
        %v954 = vpop.f32.mrf.mxu0
        %v955 = vadd.f32 %v761, %v954
        %956 = vmatmul.bf16.gmra.mxu0 %v850
        %v957 = vpop.f32.mrf.mxu0
        %v958 = vadd.f32 %v766, %v957
        %v959 = vpop.f32.mrf.mxu0
        %v960 = vadd.f32 %v771, %v959
        %961 = vmatmul.bf16.gmra.mxu0 %v853
        %v962 = vpop.f32.mrf.mxu0
        %v963 = vadd.f32 %v776, %v962
        %v964 = vpop.f32.mrf.mxu0
        %v965 = vadd.f32 %v781, %v964
        %966 = vmatmul.bf16.gmra.mxu0 %v856
        %v967 = vpop.f32.mrf.mxu0
        %v968 = vadd.f32 %v786, %v967
        %v969 = vpop.f32.mrf.mxu0
        %v970 = vadd.f32 %v791, %v969
        %971 = vdwg.mxu0
        %972 = vmatpush.bf16.msra.mxu0 0
        %973 = vmatpush.bf16.msra.mxu0 0
        %974 = vmatpush.bf16.msra.mxu0 0
        %975 = vmatpush.bf16.msra.mxu0 0
        %976 = vmatpush.bf16.msra.mxu0 0
        %977 = vmatpush.bf16.msra.mxu0 0
        %978 = vmatpush.bf16.msra.mxu0 0
        %979 = vmatpush.bf16.msra.mxu0 %v869
        %980 = vmatmul.bf16.gmra.mxu0 %v835
        %v981 = vpop.f32.mrf.mxu0
        %v982 = vadd.f32 %v716, %v981
        %v983 = vpop.f32.mrf.mxu0
        %v984 = vadd.f32 %v721, %v983
        %985 = vmatmul.bf16.gmra.mxu0 %v838
        %v986 = vpop.f32.mrf.mxu0
        %v987 = vadd.f32 %v726, %v986
        %v988 = vpop.f32.mrf.mxu0
        %v989 = vadd.f32 %v731, %v988
        %990 = vmatmul.bf16.gmra.mxu0 %v841
        %v991 = vpop.f32.mrf.mxu0
        %v992 = vadd.f32 %v736, %v991
        %v993 = vpop.f32.mrf.mxu0
        %v994 = vadd.f32 %v741, %v993
        %995 = vmatmul.bf16.gmra.mxu0 %v844
        %v996 = vpop.f32.mrf.mxu0
        %v997 = vadd.f32 %v746, %v996
        %v998 = vpop.f32.mrf.mxu0
        %v999 = vadd.f32 %v751, %v998
        %1000 = vmatmul.bf16.gmra.mxu0 %v847
        %v1001 = vpop.f32.mrf.mxu0
        %v1002 = vadd.f32 %v756, %v1001
        %v1003 = vpop.f32.mrf.mxu0
        %v1004 = vadd.f32 %v761, %v1003
        %1005 = vmatmul.bf16.gmra.mxu0 %v850
        %v1006 = vpop.f32.mrf.mxu0
        %v1007 = vadd.f32 %v766, %v1006
        %v1008 = vpop.f32.mrf.mxu0
        %v1009 = vadd.f32 %v771, %v1008
        %1010 = vmatmul.bf16.gmra.mxu0 %v853
        %v1011 = vpop.f32.mrf.mxu0
        %v1012 = vadd.f32 %v776, %v1011
        %v1013 = vpop.f32.mrf.mxu0
        %v1014 = vadd.f32 %v781, %v1013
        %1015 = vmatmul.bf16.gmra.mxu0 %v856
        %v1016 = vpop.f32.mrf.mxu0
        %v1017 = vadd.f32 %v786, %v1016
        %v1018 = vpop.f32.mrf.mxu0
        %v1019 = vadd.f32 %v791, %v1018
        %1020 = vdwg.mxu0
        %1021 = vmatpush.bf16.msra.mxu0 0
        %1022 = vmatpush.bf16.msra.mxu0 0
        %1023 = vmatpush.bf16.msra.mxu0 0
        %1024 = vmatpush.bf16.msra.mxu0 0
        %1025 = vmatpush.bf16.msra.mxu0 0
        %1026 = vmatpush.bf16.msra.mxu0 0
        %1027 = vmatpush.bf16.msra.mxu0 0
        %1028 = vmatpush.bf16.msra.mxu0 %v872
        %1029 = vmatmul.bf16.gmra.mxu0 %v835
        %v1030 = vpop.f32.mrf.mxu0
        %v1031 = vadd.f32 %v716, %v1030
        %v1032 = vpop.f32.mrf.mxu0
        %v1033 = vadd.f32 %v721, %v1032
        %1034 = vmatmul.bf16.gmra.mxu0 %v838
        %v1035 = vpop.f32.mrf.mxu0
        %v1036 = vadd.f32 %v726, %v1035
        %v1037 = vpop.f32.mrf.mxu0
        %v1038 = vadd.f32 %v731, %v1037
        %1039 = vmatmul.bf16.gmra.mxu0 %v841
        %v1040 = vpop.f32.mrf.mxu0
        %v1041 = vadd.f32 %v736, %v1040
        %v1042 = vpop.f32.mrf.mxu0
        %v1043 = vadd.f32 %v741, %v1042
        %1044 = vmatmul.bf16.gmra.mxu0 %v844
        %v1045 = vpop.f32.mrf.mxu0
        %v1046 = vadd.f32 %v746, %v1045
        %v1047 = vpop.f32.mrf.mxu0
        %v1048 = vadd.f32 %v751, %v1047
        %1049 = vmatmul.bf16.gmra.mxu0 %v847
        %v1050 = vpop.f32.mrf.mxu0
        %v1051 = vadd.f32 %v756, %v1050
        %v1052 = vpop.f32.mrf.mxu0
        %v1053 = vadd.f32 %v761, %v1052
        %1054 = vmatmul.bf16.gmra.mxu0 %v850
        %v1055 = vpop.f32.mrf.mxu0
        %v1056 = vadd.f32 %v766, %v1055
        %v1057 = vpop.f32.mrf.mxu0
        %v1058 = vadd.f32 %v771, %v1057
        %1059 = vmatmul.bf16.gmra.mxu0 %v853
        %v1060 = vpop.f32.mrf.mxu0
        %v1061 = vadd.f32 %v776, %v1060
        %v1062 = vpop.f32.mrf.mxu0
        %v1063 = vadd.f32 %v781, %v1062
        %1064 = vmatmul.bf16.gmra.mxu0 %v856
        %v1065 = vpop.f32.mrf.mxu0
        %v1066 = vadd.f32 %v786, %v1065
        %v1067 = vpop.f32.mrf.mxu0
        %v1068 = vadd.f32 %v791, %v1067
        %1069 = vdwg.mxu0
        %v1070 = vmax.f32 %v884, 0.0
        %v1071 = vmax.f32 %v933, 0.0
        %v1072 = vmax.f32 %v982, 0.0
        %v1073 = vmax.f32 %v1031, 0.0
        %v1074 = vmax.f32 %v886, 0.0
        %v1075 = vmax.f32 %v935, 0.0
        %v1076 = vmax.f32 %v984, 0.0
        %v1077 = vmax.f32 %v1033, 0.0
        %v1078 = vmax.f32 %v889, 0.0
        %v1079 = vmax.f32 %v938, 0.0
        %v1080 = vmax.f32 %v987, 0.0
        %v1081 = vmax.f32 %v1036, 0.0
        %v1082 = vmax.f32 %v891, 0.0
        %v1083 = vmax.f32 %v940, 0.0
        %v1084 = vmax.f32 %v989, 0.0
        %v1085 = vmax.f32 %v1038, 0.0
        %v1086 = vmax.f32 %v894, 0.0
        %v1087 = vmax.f32 %v943, 0.0
        %v1088 = vmax.f32 %v992, 0.0
        %v1089 = vmax.f32 %v1041, 0.0
        %v1090 = vmax.f32 %v896, 0.0
        %v1091 = vmax.f32 %v945, 0.0
        %v1092 = vmax.f32 %v994, 0.0
        %v1093 = vmax.f32 %v1043, 0.0
        %v1094 = vmax.f32 %v899, 0.0
        %v1095 = vmax.f32 %v948, 0.0
        %v1096 = vmax.f32 %v997, 0.0
        %v1097 = vmax.f32 %v1046, 0.0
        %v1098 = vmax.f32 %v901, 0.0
        %v1099 = vmax.f32 %v950, 0.0
        %v1100 = vmax.f32 %v999, 0.0
        %v1101 = vmax.f32 %v1048, 0.0
        %v1102 = vmax.f32 %v904, 0.0
        %v1103 = vmax.f32 %v953, 0.0
        %v1104 = vmax.f32 %v1002, 0.0
        %v1105 = vmax.f32 %v1051, 0.0
        %v1106 = vmax.f32 %v906, 0.0
        %v1107 = vmax.f32 %v955, 0.0
        %v1108 = vmax.f32 %v1004, 0.0
        %v1109 = vmax.f32 %v1053, 0.0
        %v1110 = vmax.f32 %v909, 0.0
        %v1111 = vmax.f32 %v958, 0.0
        %v1112 = vmax.f32 %v1007, 0.0
        %v1113 = vmax.f32 %v1056, 0.0
        %v1114 = vmax.f32 %v911, 0.0
        %v1115 = vmax.f32 %v960, 0.0
        %v1116 = vmax.f32 %v1009, 0.0
        %v1117 = vmax.f32 %v1058, 0.0
        %v1118 = vmax.f32 %v914, 0.0
        %v1119 = vmax.f32 %v963, 0.0
        %v1120 = vmax.f32 %v1012, 0.0
        %v1121 = vmax.f32 %v1061, 0.0
        %v1122 = vmax.f32 %v916, 0.0
        %v1123 = vmax.f32 %v965, 0.0
        %v1124 = vmax.f32 %v1014, 0.0
        %v1125 = vmax.f32 %v1063, 0.0
        %v1126 = vmax.f32 %v919, 0.0
        %v1127 = vmax.f32 %v968, 0.0
        %v1128 = vmax.f32 %v1017, 0.0
        %v1129 = vmax.f32 %v1066, 0.0
        %v1130 = vmax.f32 %v921, 0.0
        %v1131 = vmax.f32 %v970, 0.0
        %v1132 = vmax.f32 %v1019, 0.0
        %v1133 = vmax.f32 %v1068, 0.0
        %v1134 = vpack.c.bf16 %v1074, %v1070
        %v1135 = vpack.c.bf16 %v1075, %v1071
        %v1136 = vpack.c.bf16 %v1076, %v1072
        %v1137 = vpack.c.bf16 %v1077, %v1073
        %v1138 = vpack.c.bf16 %v1082, %v1078
        %v1139 = vpack.c.bf16 %v1083, %v1079
        %v1140 = vpack.c.bf16 %v1084, %v1080
        %v1141 = vpack.c.bf16 %v1085, %v1081
        %v1142 = vpack.c.bf16 %v1090, %v1086
        %v1143 = vpack.c.bf16 %v1091, %v1087
        %v1144 = vpack.c.bf16 %v1092, %v1088
        %v1145 = vpack.c.bf16 %v1093, %v1089
        %v1146 = vpack.c.bf16 %v1098, %v1094
        %v1147 = vpack.c.bf16 %v1099, %v1095
        %v1148 = vpack.c.bf16 %v1100, %v1096
        %v1149 = vpack.c.bf16 %v1101, %v1097
        %v1150 = vpack.c.bf16 %v1106, %v1102
        %v1151 = vpack.c.bf16 %v1107, %v1103
        %v1152 = vpack.c.bf16 %v1108, %v1104
        %v1153 = vpack.c.bf16 %v1109, %v1105
        %v1154 = vpack.c.bf16 %v1114, %v1110
        %v1155 = vpack.c.bf16 %v1115, %v1111
        %v1156 = vpack.c.bf16 %v1116, %v1112
        %v1157 = vpack.c.bf16 %v1117, %v1113
        %v1158 = vpack.c.bf16 %v1122, %v1118
        %v1159 = vpack.c.bf16 %v1123, %v1119
        %v1160 = vpack.c.bf16 %v1124, %v1120
        %v1161 = vpack.c.bf16 %v1125, %v1121
        %v1162 = vpack.c.bf16 %v1130, %v1126
        %v1163 = vpack.c.bf16 %v1131, %v1127
        %v1164 = vpack.c.bf16 %v1132, %v1128
        %v1165 = vpack.c.bf16 %v1133, %v1129
        %v1166 = vld [vmem:[%s646] sm:$0xf]
        %v1167 = vld [vmem:[%s651] sm:$0xf]
        %v1169 = vperm.slane %v1166, 0
        %v1170 = vperm.slane %v1166, 1
        %v1171 = vperm.slane %v1166, 2
        %v1172 = vperm.slane %v1166, 3
        %1178 = vset.pattern.permute.xlu0 0
        %1179 = vperm.xlu0 %1178, %v660
        %v1180 = vpop.permute.xlu0 %1179
        %1183 = vset.pattern.permute.xlu0 0
        %1184 = vperm.xlu0 %1183, %v661
        %v1185 = vpop.permute.xlu0 %1184
        %vm1187 = vcmp.ge.f32.partialorder %v1169, %v1180
        %vm1188 = vcmp.ge.f32.partialorder %v1170, %v1180
        %vm1189 = vcmp.ge.f32.partialorder %v1171, %v1180
        %vm1190 = vcmp.ge.f32.partialorder %v1172, %v1180
        %vm1191 = vcmp.ge.f32.partialorder %v1169, %v1185
        %vm1192 = vcmp.ge.f32.partialorder %v1170, %v1185
        %vm1193 = vcmp.ge.f32.partialorder %v1171, %v1185
        %vm1194 = vcmp.ge.f32.partialorder %v1172, %v1185
        %1195 = vset.pattern.permute.xlu0 2
        %1196 = vperm.xlu0 %1195, %v660
        %v1197 = vpop.permute.xlu0 %1196
        %1199 = vset.pattern.permute.xlu0 2
        %1200 = vperm.xlu0 %1199, %v661
        %v1201 = vpop.permute.xlu0 %1200
        %vm1203 = vcmp.le.f32.partialorder %v1169, %v1197
        %vm1204 = vcmp.le.f32.partialorder %v1170, %v1197
        %vm1205 = vcmp.le.f32.partialorder %v1171, %v1197
        %vm1206 = vcmp.le.f32.partialorder %v1172, %v1197
        %vm1207 = vcmp.le.f32.partialorder %v1169, %v1201
        %vm1208 = vcmp.le.f32.partialorder %v1170, %v1201
        %vm1209 = vcmp.le.f32.partialorder %v1171, %v1201
        %vm1210 = vcmp.le.f32.partialorder %v1172, %v1201
        %vm1211 = vmand %vm1187, %vm1203
        %vm1212 = vmand %vm1188, %vm1204
        %vm1213 = vmand %vm1189, %vm1205
        %vm1214 = vmand %vm1190, %vm1206
        %vm1215 = vmand %vm1191, %vm1207
        %vm1216 = vmand %vm1192, %vm1208
        %vm1217 = vmand %vm1193, %vm1209
        %vm1218 = vmand %vm1194, %vm1210
        %v1220 = vperm.slane %v1167, 0
        %v1221 = vperm.slane %v1167, 1
        %v1222 = vperm.slane %v1167, 2
        %v1223 = vperm.slane %v1167, 3
        %1228 = vset.pattern.permute.xlu0 1
        %1229 = vperm.xlu0 %1228, %v660
        %v1230 = vpop.permute.xlu0 %1229
        %1232 = vset.pattern.permute.xlu0 1
        %1233 = vperm.xlu0 %1232, %v661
        %v1234 = vpop.permute.xlu0 %1233
        %vm1236 = vcmp.ge.f32.partialorder %v1220, %v1230
        %vm1237 = vcmp.ge.f32.partialorder %v1221, %v1230
        %vm1238 = vcmp.ge.f32.partialorder %v1222, %v1230
        %vm1239 = vcmp.ge.f32.partialorder %v1223, %v1230
        %vm1240 = vcmp.ge.f32.partialorder %v1220, %v1234
        %vm1241 = vcmp.ge.f32.partialorder %v1221, %v1234
        %vm1242 = vcmp.ge.f32.partialorder %v1222, %v1234
        %vm1243 = vcmp.ge.f32.partialorder %v1223, %v1234
        %vm1244 = vmand %vm1211, %vm1236
        %vm1245 = vmand %vm1212, %vm1237
        %vm1246 = vmand %vm1213, %vm1238
        %vm1247 = vmand %vm1214, %vm1239
        %vm1248 = vmand %vm1215, %vm1240
        %vm1249 = vmand %vm1216, %vm1241
        %vm1250 = vmand %vm1217, %vm1242
        %vm1251 = vmand %vm1218, %vm1243
        %1252 = vset.pattern.permute.xlu0 3
        %1253 = vperm.xlu0 %1252, %v660
        %v1254 = vpop.permute.xlu0 %1253
        %1256 = vset.pattern.permute.xlu0 3
        %1257 = vperm.xlu0 %1256, %v661
        %v1258 = vpop.permute.xlu0 %1257
        %vm1260 = vcmp.le.f32.partialorder %v1220, %v1254
        %vm1261 = vcmp.le.f32.partialorder %v1221, %v1254
        %vm1262 = vcmp.le.f32.partialorder %v1222, %v1254
        %vm1263 = vcmp.le.f32.partialorder %v1223, %v1254
        %vm1264 = vcmp.le.f32.partialorder %v1220, %v1258
        %vm1265 = vcmp.le.f32.partialorder %v1221, %v1258
        %vm1266 = vcmp.le.f32.partialorder %v1222, %v1258
        %vm1267 = vcmp.le.f32.partialorder %v1223, %v1258
        %vm1268 = vmand %vm1244, %vm1260
        %vm1269 = vmand %vm1245, %vm1261
        %vm1270 = vmand %vm1246, %vm1262
        %vm1271 = vmand %vm1247, %vm1263
        %vm1272 = vmand %vm1248, %vm1264
        %vm1273 = vmand %vm1249, %vm1265
        %vm1274 = vmand %vm1250, %vm1266
        %vm1275 = vmand %vm1251, %vm1267
        %v1276 = vsel %vm1268, 1, 0
        %v1277 = vsel %vm1269, 1, 0
        %v1278 = vsel %vm1270, 1, 0
        %v1279 = vsel %vm1271, 1, 0
        %v1280 = vsel %vm1272, 1, 0
        %v1281 = vsel %vm1273, 1, 0
        %v1282 = vsel %vm1274, 1, 0
        %v1283 = vsel %vm1275, 1, 0
        %v1284 = vcvt.s32.f32 %v1276
        %v1285 = vcvt.s32.f32 %v1277
        %v1286 = vcvt.s32.f32 %v1278
        %v1287 = vcvt.s32.f32 %v1279
        %v1288 = vcvt.s32.f32 %v1280
        %v1289 = vcvt.s32.f32 %v1281
        %v1290 = vcvt.s32.f32 %v1282
        %v1291 = vcvt.s32.f32 %v1283
        %v1292 = vpack.c.bf16 %v1288, %v1284
        %v1293 = vpack.c.bf16 %v1289, %v1285
        %v1294 = vpack.c.bf16 %v1290, %v1286
        %v1295 = vpack.c.bf16 %v1291, %v1287
        %v1296 = vld [vmem:[#allocation2] sm:$0xff]
        %v1297 = vld [vmem:[#allocation2 + $0x8] sm:$0xff]
        %1298 = vmatpush.bf16.xpose.msra.mxu0 %v1162
        %1299 = vmatpush.bf16.xpose.msra.mxu0 %v1158
        %1300 = vmatpush.bf16.xpose.msra.mxu0 %v1154
        %1301 = vmatpush.bf16.xpose.msra.mxu0 %v1150
        %1302 = vmatpush.bf16.xpose.msra.mxu0 %v1146
        %1303 = vmatpush.bf16.xpose.msra.mxu0 %v1142
        %1304 = vmatpush.bf16.xpose.msra.mxu0 %v1138
        %1305 = vmatpush.bf16.xpose.msra.mxu0 %v1134
        %1306 = vmatmul.bf16.gmra.mxu0 %v1292
        %v1307 = vpop.f32.mrf.mxu0
        %v1308 = vadd.f32 0.0, %v1307
        %v1309 = vpop.f32.mrf.mxu0
        %v1310 = vadd.f32 0.0, %v1309
        %1311 = vdwg.mxu0
        %1312 = vmatpush.bf16.xpose.msra.mxu0 %v1163
        %1313 = vmatpush.bf16.xpose.msra.mxu0 %v1159
        %1314 = vmatpush.bf16.xpose.msra.mxu0 %v1155
        %1315 = vmatpush.bf16.xpose.msra.mxu0 %v1151
        %1316 = vmatpush.bf16.xpose.msra.mxu0 %v1147
        %1317 = vmatpush.bf16.xpose.msra.mxu0 %v1143
        %1318 = vmatpush.bf16.xpose.msra.mxu0 %v1139
        %1319 = vmatpush.bf16.xpose.msra.mxu0 %v1135
        %1320 = vmatmul.bf16.gmra.mxu0 %v1293
        %v1321 = vpop.f32.mrf.mxu0
        %v1322 = vadd.f32 %v1308, %v1321
        %v1323 = vpop.f32.mrf.mxu0
        %v1324 = vadd.f32 %v1310, %v1323
        %1325 = vdwg.mxu0
        %1326 = vmatpush.bf16.xpose.msra.mxu0 %v1164
        %1327 = vmatpush.bf16.xpose.msra.mxu0 %v1160
        %1328 = vmatpush.bf16.xpose.msra.mxu0 %v1156
        %1329 = vmatpush.bf16.xpose.msra.mxu0 %v1152
        %1330 = vmatpush.bf16.xpose.msra.mxu0 %v1148
        %1331 = vmatpush.bf16.xpose.msra.mxu0 %v1144
        %1332 = vmatpush.bf16.xpose.msra.mxu0 %v1140
        %1333 = vmatpush.bf16.xpose.msra.mxu0 %v1136
        %1334 = vmatmul.bf16.gmra.mxu0 %v1294
        %v1335 = vpop.f32.mrf.mxu0
        %v1336 = vadd.f32 %v1322, %v1335
        %v1337 = vpop.f32.mrf.mxu0
        %v1338 = vadd.f32 %v1324, %v1337
        %1339 = vdwg.mxu0
        %1340 = vmatpush.bf16.xpose.msra.mxu0 %v1165
        %1341 = vmatpush.bf16.xpose.msra.mxu0 %v1161
        %1342 = vmatpush.bf16.xpose.msra.mxu0 %v1157
        %1343 = vmatpush.bf16.xpose.msra.mxu0 %v1153
        %1344 = vmatpush.bf16.xpose.msra.mxu0 %v1149
        %1345 = vmatpush.bf16.xpose.msra.mxu0 %v1145
        %1346 = vmatpush.bf16.xpose.msra.mxu0 %v1141
        %1347 = vmatpush.bf16.xpose.msra.mxu0 %v1137
        %1348 = vmatmul.bf16.gmra.mxu0 %v1295
        %v1349 = vpop.f32.mrf.mxu0
        %v1350 = vadd.f32 %v1336, %v1349
        %v1351 = vpop.f32.mrf.mxu0
        %v1352 = vadd.f32 %v1338, %v1351
        %1353 = vdwg.mxu0
        %v1354 = vadd.f32 %v1296, %v1350
        %v1355 = vadd.f32 %v1297, %v1352
        %1356 = vst [vmem:[#allocation2] sm:$0xff] %v1354
        %1357 = vst [vmem:[#allocation2 + $0x8] sm:$0xff] %v1355
        %p1358 = scmp.eq.s32.totalorder %s36, 1
        // Predicated region
        $region105: #{tpu_custom_call.1} parent=87 // pred_check
          %p1359 = pneg %p1358
        $region106: #{tpu_custom_call.1} parent=87 // pred_check_branch
          %1361 = sbr.rel (%p1359) target = $region108
        $region107: #{tpu_custom_call.1} parent=87 // pred_region
          %v1362 = vfloor.f32 %v660
          %v1363 = vfloor.f32 %v661
          %v1364 = vceil.f32 %v660
          %v1365 = vceil.f32 %v661
          %1368 = vrot.lane.b32.xlu0 %v1364, 2
          %v1369 = vpop.permute.xlu0 %1368
          %1370 = vrot.lane.b32.xlu0 %v1365, 2
          %v1371 = vpop.permute.xlu0 %1370
          %v1374 = vsub.f32 %v1362, %v1369
          %v1375 = vsub.f32 %v1363, %v1371
          %v1376 = vadd.f32 %v1374, 1.0
          %v1377 = vadd.f32 %v1375, 1.0
          %v1378 = vmax.f32 %v1376, 0.0
          %v1379 = vmax.f32 %v1377, 0.0
          %1382 = vrot.lane.b32.xlu0 %v1378, 127
          %v1383 = vpop.permute.xlu0 %1382
          %1384 = vrot.lane.b32.xlu0 %v1379, 127
          %v1385 = vpop.permute.xlu0 %1384
          %v1388 = vmul.f32 %v1378, %v1383
          %v1389 = vmul.f32 %v1379, %v1385
          %v1390 = vmax.f32 %v1388, 1.0
          %v1391 = vmax.f32 %v1389, 1.0
          %v1392 = vld [vmem:[#allocation2] sm:$0xff]
          %v1393 = vld [vmem:[#allocation2 + $0x8] sm:$0xff]
          %v1394 = vrcp.pop %v1390
          %v1395 = vrcp.pop %v1391
          %1397 = vset.pattern.permute.xlu0 2
          %1398 = vperm.xlu0 %1397, %v1394
          %v1399 = vpop.permute.xlu0 %1398
          %1402 = vset.pattern.permute.xlu0 2
          %1403 = vperm.xlu0 %1402, %v1395
          %v1404 = vpop.permute.xlu0 %1403
          %v1406 = vmul.f32 %v1392, %v1399
          %v1407 = vmul.f32 %v1393, %v1404
          %v1408 = vpack.c.bf16 %v1407, %v1406
          %v1409 = vld [vmem:[%s7] sm:$0xf]
          %v1410 = vld [vmem:[%s7 + $0x4] sm:$0xf]
          %v1411 = vld [vmem:[%s7 + $0x8] sm:$0xf]
          %v1412 = vld [vmem:[%s7 + $0xc] sm:$0xf]
          %v1413 = vld [vmem:[%s7 + $0x10] sm:$0xf]
          %v1414 = vld [vmem:[%s7 + $0x14] sm:$0xf]
          %v1415 = vld [vmem:[%s7 + $0x18] sm:$0xf]
          %v1416 = vld [vmem:[%s7 + $0x1c] sm:$0xf]
          %v1417 = vld [vmem:[%s7 + $0x20] sm:$0xf]
          %v1418 = vld [vmem:[%s7 + $0x24] sm:$0xf]
          %v1419 = vld [vmem:[%s7 + $0x28] sm:$0xf]
          %v1420 = vld [vmem:[%s7 + $0x2c] sm:$0xf]
          %v1421 = vld [vmem:[%s7 + $0x30] sm:$0xf]
          %v1422 = vld [vmem:[%s7 + $0x34] sm:$0xf]
          %v1423 = vld [vmem:[%s7 + $0x38] sm:$0xf]
          %v1424 = vld [vmem:[%s7 + $0x3c] sm:$0xf]
          %v1425 = vld [vmem:[%s8] sm:$0x1]
          %v1427 = vperm.slane %v1425, 0
          %v1445 = vunpack.c.l.b16 %v1409
          %v1446 = vunpack.c.l.b16 %v1410
          %v1447 = vunpack.c.l.b16 %v1411
          %v1448 = vunpack.c.l.b16 %v1412
          %v1449 = vunpack.c.l.b16 %v1413
          %v1450 = vunpack.c.l.b16 %v1414
          %v1451 = vunpack.c.l.b16 %v1415
          %v1452 = vunpack.c.l.b16 %v1416
          %v1453 = vunpack.c.l.b16 %v1417
          %v1454 = vunpack.c.l.b16 %v1418
          %v1455 = vunpack.c.l.b16 %v1419
          %v1456 = vunpack.c.l.b16 %v1420
          %v1457 = vunpack.c.l.b16 %v1421
          %v1458 = vunpack.c.l.b16 %v1422
          %v1459 = vunpack.c.l.b16 %v1423
          %v1460 = vunpack.c.l.b16 %v1424
          %v1461 = vpack.c.b16 %v1446, %v1445
          %v1462 = vpack.c.b16 %v1448, %v1447
          %v1463 = vpack.c.b16 %v1450, %v1449
          %v1464 = vpack.c.b16 %v1452, %v1451
          %v1465 = vpack.c.b16 %v1454, %v1453
          %v1466 = vpack.c.b16 %v1456, %v1455
          %v1467 = vpack.c.b16 %v1458, %v1457
          %v1468 = vpack.c.b16 %v1460, %v1459
          %1477 = vmatpush.bf16.msra.mxu0 %v1468
          %1478 = vmatpush.bf16.msra.mxu0 %v1467
          %1479 = vmatpush.bf16.msra.mxu0 %v1466
          %1480 = vmatpush.bf16.msra.mxu0 %v1465
          %1481 = vmatpush.bf16.msra.mxu0 %v1464
          %1482 = vmatpush.bf16.msra.mxu0 %v1463
          %1483 = vmatpush.bf16.msra.mxu0 %v1462
          %1484 = vmatpush.bf16.msra.mxu0 %v1461
          %1485 = vmatmul.bf16.gmra.mxu0 %v1408
          %v1486 = vpop.f32.mrf.mxu0
          %v1487 = vadd.f32 %v1427, %v1486
          %v1488 = vpop.f32.mrf.mxu0
          %v1489 = vadd.f32 %v1427, %v1488
          %1490 = vdwg.mxu0
          %v1491 = vmax.f32 %v1487, 0.0
          %v1492 = vmax.f32 %v1489, 0.0
          %v1493 = vld [vmem:[%s4] sm:$0xf]
          %1494 = vrot.lane.b32.xlu0 %v660, 2
          %v1495 = vpop.permute.xlu0 %1494
          %1496 = vrot.lane.b32.xlu0 %v661, 2
          %v1497 = vpop.permute.xlu0 %1496
          %v1500 = vsub.f32 %v660, %v1495
          %v1501 = vsub.f32 %v661, %v1497
          %v1502 = vadd.f32 %v1500, 1.0
          %v1503 = vadd.f32 %v1501, 1.0
          %1506 = vrot.lane.b32.xlu0 %v1502, 127
          %v1507 = vpop.permute.xlu0 %1506
          %1508 = vrot.lane.b32.xlu0 %v1503, 127
          %v1509 = vpop.permute.xlu0 %1508
          %v1512 = vmul.f32 %v1502, %v1507
          %v1513 = vmul.f32 %v1503, %v1509
          %v1515 = vrot.slane %v1493, 6
          %v1517 = vsub.f32 %v1493, %v1515
          %v1518 = vadd.f32 %v1517, 1.0
          %v1520 = vrot.slane %v1518, 1
          %v1522 = vmul.f32 %v1518, %v1520
          %v1523 = vperm.slane %v1493, 2
          %v1524 = vmin.f32 %v1197, %v1523
          %v1525 = vmin.f32 %v1201, %v1523
          %v1526 = vperm.slane %v1493, 0
          %v1527 = vmax.f32 %v1180, %v1526
          %v1528 = vmax.f32 %v1185, %v1526
          %v1529 = vsub.f32 %v1524, %v1527
          %v1530 = vsub.f32 %v1525, %v1528
          %v1531 = vadd.f32 %v1529, 1.0
          %v1532 = vadd.f32 %v1530, 1.0
          %v1533 = vmax.f32 %v1531, 0.0
          %v1534 = vmax.f32 %v1532, 0.0
          %v1535 = vperm.slane %v1493, 3
          %v1536 = vmin.f32 %v1254, %v1535
          %v1537 = vmin.f32 %v1258, %v1535
          %v1538 = vperm.slane %v1493, 1
          %v1539 = vmax.f32 %v1230, %v1538
          %v1540 = vmax.f32 %v1234, %v1538
          %v1541 = vsub.f32 %v1536, %v1539
          %v1542 = vsub.f32 %v1537, %v1540
          %v1543 = vadd.f32 %v1541, 1.0
          %v1544 = vadd.f32 %v1542, 1.0
          %v1545 = vmax.f32 %v1543, 0.0
          %v1546 = vmax.f32 %v1544, 0.0
          %v1547 = vmul.f32 %v1533, %v1545
          %v1548 = vmul.f32 %v1534, %v1546
          %1550 = vset.pattern.permute.xlu0 2
          %1551 = vperm.xlu0 %1550, %v1512
          %v1552 = vpop.permute.xlu0 %1551
          %1555 = vset.pattern.permute.xlu0 2
          %1556 = vperm.xlu0 %1555, %v1513
          %v1557 = vpop.permute.xlu0 %1556
          %v1559 = vperm.slane %v1522, 2
          %v1560 = vadd.f32 %v1552, %v1559
          %v1561 = vadd.f32 %v1557, %v1559
          %v1562 = vsub.f32 %v1560, %v1547
          %v1563 = vsub.f32 %v1561, %v1548
          %v1564 = vrcp.pop %v1562
          %v1565 = vrcp.pop %v1563
          %v1566 = vmul.f32 %v1547, %v1564
          %v1567 = vmul.f32 %v1548, %v1565
          %1568 = vrot.lane.b32.xlu0 %v660, 126
          %v1569 = vpop.permute.xlu0 %1568
          %1570 = vrot.lane.b32.xlu0 %v661, 126
          %v1571 = vpop.permute.xlu0 %1570
          %v1574 = vadd.f32 %v660, %v1569
          %v1575 = vadd.f32 %v661, %v1571
          %v1576 = vmul.f32 %v1574, 0.5
          %v1577 = vmul.f32 %v1575, 0.5
          %v1578 = vrot.slane %v1493, 2
          %v1580 = vadd.f32 %v1493, %v1578
          %v1581 = vmul.f32 %v1580, 0.5
          %1583 = vset.pattern.permute.xlu0 0
          %1584 = vperm.xlu0 %1583, %v1576
          %v1585 = vpop.permute.xlu0 %1584
          %1588 = vset.pattern.permute.xlu0 0
          %1589 = vperm.xlu0 %1588, %v1577
          %v1590 = vpop.permute.xlu0 %1589
          %v1592 = vperm.slane %v1581, 0
          %v1593 = vsub.f32 %v1585, %v1592
          %v1594 = vsub.f32 %v1590, %v1592
          %1595 = vset.pattern.permute.xlu0 1
          %1596 = vperm.xlu0 %1595, %v1576
          %v1597 = vpop.permute.xlu0 %1596
          %1599 = vset.pattern.permute.xlu0 1
          %1600 = vperm.xlu0 %1599, %v1577
          %v1601 = vpop.permute.xlu0 %1600
          %v1603 = vperm.slane %v1581, 1
          %v1604 = vsub.f32 %v1597, %v1603
          %v1605 = vsub.f32 %v1601, %v1603
          %v1606 = vmul.f32 %v1593, %v1593
          %v1607 = vmul.f32 %v1594, %v1594
          %v1608 = vmul.f32 %v1604, %v1604
          %v1609 = vmul.f32 %v1605, %v1605
          %v1610 = vadd.f32 %v1606, %v1608
          %v1611 = vadd.f32 %v1607, %v1609
          %v1612 = vrsqrt.pop %v1610
          %v1613 = vmul.f32 %v1612, %v1610
          %v1614 = vmul.f32 %v1613, %v1612
          %v1615 = vmul.f32 0.5, %v1614
          %v1616 = vsub.f32 1.5, %v1615
          %v1617 = vmul.f32 %v1612, %v1616
          %v1618 = vmul.f32 %v1610, %v1617
          %vm1619 = vcmp.eq.f32.partialorder %v1610, inf
          %v1620 = vsel %vm1619, %v1610, %v1618
          %vm1621 = vcmp.eq.f32.partialorder %v1610, 0.0
          %v1622 = vand.u32 %v1610, 2147483648
          %v1623 = vsel %vm1621, %v1622, %v1620
          %v1624 = vrsqrt.pop %v1611
          %v1625 = vmul.f32 %v1624, %v1611
          %v1626 = vmul.f32 %v1625, %v1624
          %v1627 = vmul.f32 0.5, %v1626
          %v1628 = vsub.f32 1.5, %v1627
          %v1629 = vmul.f32 %v1624, %v1628
          %v1630 = vmul.f32 %v1611, %v1629
          %vm1631 = vcmp.eq.f32.partialorder %v1611, inf
          %v1632 = vsel %vm1631, %v1611, %v1630
          %vm1633 = vcmp.eq.f32.partialorder %v1611, 0.0
          %v1634 = vand.u32 %v1611, 2147483648
          %v1635 = vsel %vm1633, %v1634, %v1632
          %v1636 = vmul.f32 %v1623, 0.022097087
          %v1637 = vmul.f32 %v1635, 0.022097087
          %vm1638 = vcmp.ge.f32.partialorder %v1566, 0.7
          %vm1639 = vcmp.ge.f32.partialorder %v1567, 0.7
          %vm1640 = vcmp.lt.f32.partialorder %v1636, 0.01
          %vm1641 = vcmp.lt.f32.partialorder %v1637, 0.01
          %vm1642 = vmor %vm1638, %vm1640
          %vm1643 = vmor %vm1639, %vm1641
          %v1644 = vsel %vm1642, 1, 0
          %v1645 = vsel %vm1643, 1, 0
          %v1646 = vcvt.s32.f32 %v1644
          %v1647 = vcvt.s32.f32 %v1645
          %v1648 = vpack.c.bf16 %v1646, %v1646
          %v1649 = vpack.c.bf16 %v1647, %v1647
          %v1650 = vlaneseq
          %v1651 = vshrl.u32 %v1650, 7
          %v1652 = vadd.s32 %v1651, 8
          %v1653 = vlaneseq
          %v1654 = vand.u32 %v1653, 127
          %vm1655 = vcmp.le.s32.totalorder %v1651, %v1654
          %vm1656 = vcmp.le.s32.totalorder %v1652, %v1654
          %v1657 = vsel %vm1655, 1, 0
          %v1658 = vsel %vm1656, 1, 0
          %v1659 = vcvt.s32.f32 %v1657
          %v1660 = vcvt.s32.f32 %v1658
          %v1661 = vpack.c.bf16 %v1660, %v1659
          %v1664 = vunpack.c.l.b16 %v1648
          %v1665 = vunpack.c.l.b16 %v1649
          %v1666 = vpack.c.b16 %v1665, %v1664
          %vm1667 = vcmask 130048
          %v1669 = vsel %vm1667, %v1666, 0
          %1671 = vmatpush.bf16.msra.mxu0 0
          %1672 = vmatpush.bf16.msra.mxu0 0
          %1673 = vmatpush.bf16.msra.mxu0 0
          %1674 = vmatpush.bf16.msra.mxu0 0
          %1675 = vmatpush.bf16.msra.mxu0 0
          %1676 = vmatpush.bf16.msra.mxu0 0
          %1677 = vmatpush.bf16.msra.mxu0 0
          %1678 = vmatpush.bf16.msra.mxu0 %v1661
          %1679 = vmatmul.bf16.gmra.mxu0 %v1669
          %v1680 = vpop.f32.mrf.mxu0
          %v1681 = vadd.f32 0.0, %v1680
          %v1682 = vpop.f32.mrf.mxu0
          %v1683 = vadd.f32 0.0, %v1682
          %1684 = vdwg.mxu0
          %v1685 = vunpack.c.l.bf16 %v1648
          %v1686 = vunpack.c.l.bf16 %v1649
          %vm1687 = vcmp.gt.f32.partialorder %v1685, 0.0
          %vm1688 = vcmp.gt.f32.partialorder %v1686, 0.0
          %vm1689 = vcmp.le.f32.partialorder %v1681, 4.0
          %vm1690 = vcmp.le.f32.partialorder %v1683, 4.0
          %vm1691 = vmand %vm1687, %vm1689
          %vm1692 = vmand %vm1688, %vm1690
          %v1693 = vsel %vm1691, 1.0, 0.0
          %v1694 = vsel %vm1692, 1.0, 0.0
          %vm1695 = vcmp.eq.s32.totalorder %v1651, %v1654
          %vm1696 = vcmp.eq.s32.totalorder %v1652, %v1654
          %v1697 = vsel %vm1695, 1, 0
          %v1698 = vsel %vm1696, 1, 0
          %v1699 = vcvt.s32.f32 %v1697
          %v1700 = vcvt.s32.f32 %v1698
          %v1701 = vmax.f32 %v1699, %v1693
          %v1702 = vmax.f32 %v1700, %v1694
          %v1703 = vmul.f32 %v1491, %v1491
          %v1704 = vmul.f32 %v1492, %v1492
          %1705 = vadd.xlane.f32.xlu0 %v1703
          %v1706 = vpop.xlane.xlu0 %1705
          %1707 = vadd.xlane.f32.xlu0 %v1704
          %v1708 = vpop.xlane.xlu0 %1707
          %v1709 = vrsqrt.pop %v1706
          %v1710 = vmul.f32 %v1709, %v1706
          %v1711 = vmul.f32 %v1710, %v1709
          %v1712 = vmul.f32 0.5, %v1711
          %v1713 = vsub.f32 1.5, %v1712
          %v1714 = vmul.f32 %v1709, %v1713
          %v1715 = vmul.f32 %v1706, %v1714
          %vm1716 = vcmp.eq.f32.partialorder %v1706, inf
          %v1717 = vsel %vm1716, %v1706, %v1715
          %vm1718 = vcmp.eq.f32.partialorder %v1706, 0.0
          %v1719 = vand.u32 %v1706, 2147483648
          %v1720 = vsel %vm1718, %v1719, %v1717
          %v1721 = vrsqrt.pop %v1708
          %v1722 = vmul.f32 %v1721, %v1708
          %v1723 = vmul.f32 %v1722, %v1721
          %v1724 = vmul.f32 0.5, %v1723
          %v1725 = vsub.f32 1.5, %v1724
          %v1726 = vmul.f32 %v1721, %v1725
          %v1727 = vmul.f32 %v1708, %v1726
          %vm1728 = vcmp.eq.f32.partialorder %v1708, inf
          %v1729 = vsel %vm1728, %v1708, %v1727
          %vm1730 = vcmp.eq.f32.partialorder %v1708, 0.0
          %v1731 = vand.u32 %v1708, 2147483648
          %v1732 = vsel %vm1730, %v1731, %v1729
          %v1733 = vadd.f32 %v1720, 1e-08
          %v1734 = vadd.f32 %v1732, 1e-08
          %v1735 = vrcp.pop %v1733
          %v1736 = vrcp.pop %v1734
          %v1737 = vmul.f32 %v1491, %v1735
          %v1738 = vmul.f32 %v1492, %v1736
          %v1739 = vpack.c.bf16 %v1738, %v1737
          %1740 = vmatpush.bf16.xpose.msra.mxu0 0
          %1741 = vmatpush.bf16.xpose.msra.mxu0 0
          %1742 = vmatpush.bf16.xpose.msra.mxu0 0
          %1743 = vmatpush.bf16.xpose.msra.mxu0 0
          %1744 = vmatpush.bf16.xpose.msra.mxu0 0
          %1745 = vmatpush.bf16.xpose.msra.mxu0 0
          %1746 = vmatpush.bf16.xpose.msra.mxu0 0
          %1747 = vmatpush.bf16.xpose.msra.mxu0 %v1739
          %1748 = vmatmul.bf16.gmra.mxu0 %v1739
          %v1749 = vpop.f32.mrf.mxu0
          %v1750 = vadd.f32 0.0, %v1749
          %v1751 = vpop.f32.mrf.mxu0
          %v1752 = vadd.f32 0.0, %v1751
          %1753 = vdwg.mxu0
          %v1754 = vmul.f32 %v1701, %v1750
          %v1755 = vmul.f32 %v1702, %v1752
          %v1756 = vpack.c.bf16 %v1755, %v1754
          %v1757 = vpack.c.bf16 %v1492, %v1491
          %v1758 = vld [vmem:[%s9] sm:$0xf]
          %v1759 = vld [vmem:[%s9 + $0x4] sm:$0xf]
          %v1760 = vld [vmem:[%s9 + $0x8] sm:$0xf]
          %v1761 = vld [vmem:[%s9 + $0xc] sm:$0xf]
          %v1762 = vld [vmem:[%s9 + $0x10] sm:$0xf]
          %v1763 = vld [vmem:[%s9 + $0x14] sm:$0xf]
          %v1764 = vld [vmem:[%s9 + $0x18] sm:$0xf]
          %v1765 = vld [vmem:[%s9 + $0x1c] sm:$0xf]
          %v1766 = vld [vmem:[%s9 + $0x20] sm:$0xf]
          %v1767 = vld [vmem:[%s9 + $0x24] sm:$0xf]
          %v1768 = vld [vmem:[%s9 + $0x28] sm:$0xf]
          %v1769 = vld [vmem:[%s9 + $0x2c] sm:$0xf]
          %v1770 = vld [vmem:[%s9 + $0x30] sm:$0xf]
          %v1771 = vld [vmem:[%s9 + $0x34] sm:$0xf]
          %v1772 = vld [vmem:[%s9 + $0x38] sm:$0xf]
          %v1773 = vld [vmem:[%s9 + $0x3c] sm:$0xf]
          %v1790 = vunpack.c.l.b16 %v1758
          %v1791 = vunpack.c.l.b16 %v1759
          %v1792 = vunpack.c.l.b16 %v1760
          %v1793 = vunpack.c.l.b16 %v1761
          %v1794 = vunpack.c.l.b16 %v1762
          %v1795 = vunpack.c.l.b16 %v1763
          %v1796 = vunpack.c.l.b16 %v1764
          %v1797 = vunpack.c.l.b16 %v1765
          %v1798 = vunpack.c.l.b16 %v1766
          %v1799 = vunpack.c.l.b16 %v1767
          %v1800 = vunpack.c.l.b16 %v1768
          %v1801 = vunpack.c.l.b16 %v1769
          %v1802 = vunpack.c.l.b16 %v1770
          %v1803 = vunpack.c.l.b16 %v1771
          %v1804 = vunpack.c.l.b16 %v1772
          %v1805 = vunpack.c.l.b16 %v1773
          %v1806 = vpack.c.b16 %v1791, %v1790
          %v1807 = vpack.c.b16 %v1793, %v1792
          %v1808 = vpack.c.b16 %v1795, %v1794
          %v1809 = vpack.c.b16 %v1797, %v1796
          %v1810 = vpack.c.b16 %v1799, %v1798
          %v1811 = vpack.c.b16 %v1801, %v1800
          %v1812 = vpack.c.b16 %v1803, %v1802
          %v1813 = vpack.c.b16 %v1805, %v1804
          %1822 = vmatpush.bf16.msra.mxu0 %v1813
          %1823 = vmatpush.bf16.msra.mxu0 %v1812
          %1824 = vmatpush.bf16.msra.mxu0 %v1811
          %1825 = vmatpush.bf16.msra.mxu0 %v1810
          %1826 = vmatpush.bf16.msra.mxu0 %v1809
          %1827 = vmatpush.bf16.msra.mxu0 %v1808
          %1828 = vmatpush.bf16.msra.mxu0 %v1807
          %1829 = vmatpush.bf16.msra.mxu0 %v1806
          %1830 = vmatmul.bf16.gmra.mxu0 %v1757
          %v1831 = vpop.f32.mrf.mxu0
          %v1832 = vadd.f32 0.0, %v1831
          %v1833 = vpop.f32.mrf.mxu0
          %v1834 = vadd.f32 0.0, %v1833
          %1835 = vdwg.mxu0
          %v1836 = vpack.c.bf16 %v1834, %v1832
          %v1837 = vld [vmem:[%s10] sm:$0x1]
          %v1839 = vperm.slane %v1837, 0
          %v1842 = vsel %vm1667, %v1756, 0
          %1844 = vmatpush.bf16.msra.mxu0 0
          %1845 = vmatpush.bf16.msra.mxu0 0
          %1846 = vmatpush.bf16.msra.mxu0 0
          %1847 = vmatpush.bf16.msra.mxu0 0
          %1848 = vmatpush.bf16.msra.mxu0 0
          %1849 = vmatpush.bf16.msra.mxu0 0
          %1850 = vmatpush.bf16.msra.mxu0 0
          %1851 = vmatpush.bf16.msra.mxu0 %v1836
          %1852 = vmatmul.bf16.gmra.mxu0 %v1842
          %v1853 = vpop.f32.mrf.mxu0
          %v1854 = vadd.f32 %v1839, %v1853
          %v1855 = vpop.f32.mrf.mxu0
          %v1856 = vadd.f32 %v1839, %v1855
          %1857 = vdwg.mxu0
          %v1858 = vmax.f32 %v1854, 0.0
          %v1859 = vmax.f32 %v1856, 0.0
          %v1860 = vpack.c.bf16 %v1859, %v1858
          %v1861 = vld [vmem:[%s11] sm:$0xf]
          %v1862 = vld [vmem:[%s11 + $0x4] sm:$0xf]
          %v1863 = vld [vmem:[%s11 + $0x8] sm:$0xf]
          %v1864 = vld [vmem:[%s11 + $0xc] sm:$0xf]
          %v1865 = vld [vmem:[%s11 + $0x10] sm:$0xf]
          %v1866 = vld [vmem:[%s11 + $0x14] sm:$0xf]
          %v1867 = vld [vmem:[%s11 + $0x18] sm:$0xf]
          %v1868 = vld [vmem:[%s11 + $0x1c] sm:$0xf]
          %v1869 = vld [vmem:[%s11 + $0x20] sm:$0xf]
          %v1870 = vld [vmem:[%s11 + $0x24] sm:$0xf]
          %v1871 = vld [vmem:[%s11 + $0x28] sm:$0xf]
          %v1872 = vld [vmem:[%s11 + $0x2c] sm:$0xf]
          %v1873 = vld [vmem:[%s11 + $0x30] sm:$0xf]
          %v1874 = vld [vmem:[%s11 + $0x34] sm:$0xf]
          %v1875 = vld [vmem:[%s11 + $0x38] sm:$0xf]
          %v1876 = vld [vmem:[%s11 + $0x3c] sm:$0xf]
          %v1893 = vunpack.c.l.b16 %v1861
          %v1894 = vunpack.c.l.b16 %v1862
          %v1895 = vunpack.c.l.b16 %v1863
          %v1896 = vunpack.c.l.b16 %v1864
          %v1897 = vunpack.c.l.b16 %v1865
          %v1898 = vunpack.c.l.b16 %v1866
          %v1899 = vunpack.c.l.b16 %v1867
          %v1900 = vunpack.c.l.b16 %v1868
          %v1901 = vunpack.c.l.b16 %v1869
          %v1902 = vunpack.c.l.b16 %v1870
          %v1903 = vunpack.c.l.b16 %v1871
          %v1904 = vunpack.c.l.b16 %v1872
          %v1905 = vunpack.c.l.b16 %v1873
          %v1906 = vunpack.c.l.b16 %v1874
          %v1907 = vunpack.c.l.b16 %v1875
          %v1908 = vunpack.c.l.b16 %v1876
          %v1909 = vpack.c.b16 %v1894, %v1893
          %v1910 = vpack.c.b16 %v1896, %v1895
          %v1911 = vpack.c.b16 %v1898, %v1897
          %v1912 = vpack.c.b16 %v1900, %v1899
          %v1913 = vpack.c.b16 %v1902, %v1901
          %v1914 = vpack.c.b16 %v1904, %v1903
          %v1915 = vpack.c.b16 %v1906, %v1905
          %v1916 = vpack.c.b16 %v1908, %v1907
          %1925 = vmatpush.bf16.msra.mxu0 %v1916
          %1926 = vmatpush.bf16.msra.mxu0 %v1915
          %1927 = vmatpush.bf16.msra.mxu0 %v1914
          %1928 = vmatpush.bf16.msra.mxu0 %v1913
          %1929 = vmatpush.bf16.msra.mxu0 %v1912
          %1930 = vmatpush.bf16.msra.mxu0 %v1911
          %1931 = vmatpush.bf16.msra.mxu0 %v1910
          %1932 = vmatpush.bf16.msra.mxu0 %v1909
          %1933 = vmatmul.bf16.gmra.mxu0 %v1860
          %v1934 = vpop.f32.mrf.mxu0
          %v1935 = vadd.f32 0.0, %v1934
          %v1936 = vpop.f32.mrf.mxu0
          %v1937 = vadd.f32 0.0, %v1936
          %1938 = vdwg.mxu0
          %v1939 = vpack.c.bf16 %v1937, %v1935
          %v1940 = vld [vmem:[%s12] sm:$0x1]
          %v1942 = vperm.slane %v1940, 0
          %1944 = vmatpush.bf16.msra.mxu0 0
          %1945 = vmatpush.bf16.msra.mxu0 0
          %1946 = vmatpush.bf16.msra.mxu0 0
          %1947 = vmatpush.bf16.msra.mxu0 0
          %1948 = vmatpush.bf16.msra.mxu0 0
          %1949 = vmatpush.bf16.msra.mxu0 0
          %1950 = vmatpush.bf16.msra.mxu0 0
          %1951 = vmatpush.bf16.msra.mxu0 %v1939
          %1952 = vmatmul.bf16.gmra.mxu0 %v1842
          %v1953 = vpop.f32.mrf.mxu0
          %v1954 = vadd.f32 %v1942, %v1953
          %v1955 = vpop.f32.mrf.mxu0
          %v1956 = vadd.f32 %v1942, %v1955
          %1957 = vdwg.mxu0
          %v1958 = vmax.f32 %v1954, 0.0
          %v1959 = vmax.f32 %v1956, 0.0
          %v1960 = vpack.c.bf16 %v1959, %v1958
          %v1961 = vld [vmem:[#allocation6] sm:$0xf]
          %v1962 = vld [vmem:[#allocation6 + $0x4] sm:$0xf]
          %v1963 = vld [vmem:[#allocation6 + $0x8] sm:$0xf]
          %v1964 = vld [vmem:[#allocation6 + $0xc] sm:$0xf]
          %v1965 = vld [vmem:[#allocation6 + $0x10] sm:$0xf]
          %v1966 = vld [vmem:[#allocation6 + $0x14] sm:$0xf]
          %v1967 = vld [vmem:[#allocation6 + $0x18] sm:$0xf]
          %v1968 = vld [vmem:[#allocation6 + $0x1c] sm:$0xf]
          %v1969 = vld [vmem:[#allocation6 + $0x20] sm:$0xf]
          %v1970 = vld [vmem:[#allocation6 + $0x24] sm:$0xf]
          %v1971 = vld [vmem:[#allocation6 + $0x28] sm:$0xf]
          %v1972 = vld [vmem:[#allocation6 + $0x2c] sm:$0xf]
          %v1973 = vld [vmem:[#allocation6 + $0x30] sm:$0xf]
          %v1974 = vld [vmem:[#allocation6 + $0x34] sm:$0xf]
          %v1975 = vld [vmem:[#allocation6 + $0x38] sm:$0xf]
          %v1976 = vld [vmem:[#allocation6 + $0x3c] sm:$0xf]
          %v1977 = vld [vmem:[%s14] sm:$0x1]
          %v1979 = vperm.slane %v1977, 0
          %v1997 = vunpack.c.l.b16 %v1961
          %v1998 = vunpack.c.l.b16 %v1962
          %v1999 = vunpack.c.l.b16 %v1963
          %v2000 = vunpack.c.l.b16 %v1964
          %v2001 = vunpack.c.l.b16 %v1965
          %v2002 = vunpack.c.l.b16 %v1966
          %v2003 = vunpack.c.l.b16 %v1967
          %v2004 = vunpack.c.l.b16 %v1968
          %v2005 = vunpack.c.l.b16 %v1969
          %v2006 = vunpack.c.l.b16 %v1970
          %v2007 = vunpack.c.l.b16 %v1971
          %v2008 = vunpack.c.l.b16 %v1972
          %v2009 = vunpack.c.l.b16 %v1973
          %v2010 = vunpack.c.l.b16 %v1974
          %v2011 = vunpack.c.l.b16 %v1975
          %v2012 = vunpack.c.l.b16 %v1976
          %v2013 = vpack.c.b16 %v1998, %v1997
          %v2014 = vpack.c.b16 %v2000, %v1999
          %v2015 = vpack.c.b16 %v2002, %v2001
          %v2016 = vpack.c.b16 %v2004, %v2003
          %v2017 = vpack.c.b16 %v2006, %v2005
          %v2018 = vpack.c.b16 %v2008, %v2007
          %v2019 = vpack.c.b16 %v2010, %v2009
          %v2020 = vpack.c.b16 %v2012, %v2011
          %2029 = vmatpush.bf16.msra.mxu0 %v2020
          %2030 = vmatpush.bf16.msra.mxu0 %v2019
          %2031 = vmatpush.bf16.msra.mxu0 %v2018
          %2032 = vmatpush.bf16.msra.mxu0 %v2017
          %2033 = vmatpush.bf16.msra.mxu0 %v2016
          %2034 = vmatpush.bf16.msra.mxu0 %v2015
          %2035 = vmatpush.bf16.msra.mxu0 %v2014
          %2036 = vmatpush.bf16.msra.mxu0 %v2013
          %2037 = vmatmul.bf16.gmra.mxu0 %v1960
          %v2038 = vpop.f32.mrf.mxu0
          %v2039 = vadd.f32 %v1979, %v2038
          %v2040 = vpop.f32.mrf.mxu0
          %v2041 = vadd.f32 %v1979, %v2040
          %2042 = vdwg.mxu0
          %2043 = vmax.xlane.f32.xlu0 %v2039
          %v2044 = vpop.xlane.xlu0 %2043
          %2045 = vmax.xlane.f32.xlu0 %v2041
          %v2046 = vpop.xlane.xlu0 %2045
          %v2047 = vsub.f32 %v2039, %v2044
          %v2048 = vsub.f32 %v2041, %v2046
          %v2049 = vmul.f32 %v2047, 1.442695
          %v2050 = vpow.pop %v2049
          %v2051 = vmul.f32 %v2048, 1.442695
          %v2052 = vpow.pop %v2051
          %2053 = vadd.xlane.f32.xlu0 %v2050
          %v2054 = vpop.xlane.xlu0 %2053
          %2055 = vadd.xlane.f32.xlu0 %v2052
          %v2056 = vpop.xlane.xlu0 %2055
          %v2057 = vrcp.pop %v2054
          %v2058 = vmul.f32 %v2054, %v2057
          %v2059 = vsub.f32 1.0, %v2058
          %v2060 = vmul.f32 %v2057, %v2059
          %v2061 = vadd.f32 %v2057, %v2060
          %vm2062 = vweird.f32 %v2054
          %vm2063 = vweird.f32 %v2057
          %vm2064 = vmor %vm2062, %vm2063
          %v2065 = vsel %vm2064, %v2057, %v2061
          %v2066 = vand.u32 2147483647, %v2054
          %vm2067 = vcmp.eq.f32.partialorder %v2066, 8.507059e+37
          %v2068 = vand.u32 %v2054, 2147483648
          %v2069 = vor.u32 1.1754944e-38, %v2068
          %v2070 = vsel %vm2067, %v2069, %v2065
          %v2071 = vmul.f32 %v2050, %v2070
          %v2072 = vrcp.pop %v2056
          %v2073 = vmul.f32 %v2056, %v2072
          %v2074 = vsub.f32 1.0, %v2073
          %v2075 = vmul.f32 %v2072, %v2074
          %v2076 = vadd.f32 %v2072, %v2075
          %vm2077 = vweird.f32 %v2056
          %vm2078 = vweird.f32 %v2072
          %vm2079 = vmor %vm2077, %vm2078
          %v2080 = vsel %vm2079, %v2072, %v2076
          %v2081 = vand.u32 2147483647, %v2056
          %vm2082 = vcmp.eq.f32.partialorder %v2081, 8.507059e+37
          %v2083 = vand.u32 %v2056, 2147483648
          %v2084 = vor.u32 1.1754944e-38, %v2083
          %v2085 = vsel %vm2082, %v2084, %v2080
          %v2086 = vmul.f32 %v2052, %v2085
          %2087 = vst [vmem:[#allocation9] sm:$0xff] %v2071
          %2088 = vst [vmem:[#allocation9 + $0x8] sm:$0xff] %v2086
          %v2089 = vld [vmem:[#allocation8] sm:$0xf]
          %v2090 = vld [vmem:[#allocation8 + $0x4] sm:$0xf]
          %v2091 = vld [vmem:[#allocation8 + $0x8] sm:$0xf]
          %v2092 = vld [vmem:[#allocation8 + $0xc] sm:$0xf]
          %v2093 = vld [vmem:[#allocation8 + $0x10] sm:$0xf]
          %v2094 = vld [vmem:[#allocation8 + $0x14] sm:$0xf]
          %v2095 = vld [vmem:[#allocation8 + $0x18] sm:$0xf]
          %v2096 = vld [vmem:[#allocation8 + $0x1c] sm:$0xf]
          %v2097 = vld [vmem:[#allocation8 + $0x20] sm:$0xf]
          %v2098 = vld [vmem:[#allocation8 + $0x24] sm:$0xf]
          %v2099 = vld [vmem:[#allocation8 + $0x28] sm:$0xf]
          %v2100 = vld [vmem:[#allocation8 + $0x2c] sm:$0xf]
          %v2101 = vld [vmem:[#allocation8 + $0x30] sm:$0xf]
          %v2102 = vld [vmem:[#allocation8 + $0x34] sm:$0xf]
          %v2103 = vld [vmem:[#allocation8 + $0x38] sm:$0xf]
          %v2104 = vld [vmem:[#allocation8 + $0x3c] sm:$0xf]
          %v2105 = vld [vmem:[%s16] sm:$0x1]
          %v2107 = vperm.slane %v2105, 0
          %v2125 = vunpack.c.l.b16 %v2089
          %v2126 = vunpack.c.l.b16 %v2090
          %v2127 = vunpack.c.l.b16 %v2091
          %v2128 = vunpack.c.l.b16 %v2092
          %v2129 = vunpack.c.l.b16 %v2093
          %v2130 = vunpack.c.l.b16 %v2094
          %v2131 = vunpack.c.l.b16 %v2095
          %v2132 = vunpack.c.l.b16 %v2096
          %v2133 = vunpack.c.l.b16 %v2097
          %v2134 = vunpack.c.l.b16 %v2098
          %v2135 = vunpack.c.l.b16 %v2099
          %v2136 = vunpack.c.l.b16 %v2100
          %v2137 = vunpack.c.l.b16 %v2101
          %v2138 = vunpack.c.l.b16 %v2102
          %v2139 = vunpack.c.l.b16 %v2103
          %v2140 = vunpack.c.l.b16 %v2104
          %v2141 = vpack.c.b16 %v2126, %v2125
          %v2142 = vpack.c.b16 %v2128, %v2127
          %v2143 = vpack.c.b16 %v2130, %v2129
          %v2144 = vpack.c.b16 %v2132, %v2131
          %v2145 = vpack.c.b16 %v2134, %v2133
          %v2146 = vpack.c.b16 %v2136, %v2135
          %v2147 = vpack.c.b16 %v2138, %v2137
          %v2148 = vpack.c.b16 %v2140, %v2139
          %2157 = vmatpush.bf16.msra.mxu0 %v2148
          %2158 = vmatpush.bf16.msra.mxu0 %v2147
          %2159 = vmatpush.bf16.msra.mxu0 %v2146
          %2160 = vmatpush.bf16.msra.mxu0 %v2145
          %2161 = vmatpush.bf16.msra.mxu0 %v2144
          %2162 = vmatpush.bf16.msra.mxu0 %v2143
          %2163 = vmatpush.bf16.msra.mxu0 %v2142
          %2164 = vmatpush.bf16.msra.mxu0 %v2141
          %2165 = vmatmul.bf16.gmra.mxu0 %v1960
          %v2166 = vpop.f32.mrf.mxu0
          %v2167 = vadd.f32 %v2107, %v2166
          %v2168 = vpop.f32.mrf.mxu0
          %v2169 = vadd.f32 %v2107, %v2168
          %2170 = vdwg.mxu0
          %2171 = vst [vmem:[#allocation10] sm:$0xff] %v2167
          %2172 = vst [vmem:[#allocation10 + $0x8] sm:$0xff] %v2169
        $region108: #{tpu_custom_call.1} parent=87 // pred_fallthru
          _
        // Predicated region
        $region109: #{tpu_custom_call.1} parent=87 // pred_check
          %p2173 = pneg %p421
        $region110: #{tpu_custom_call.1} parent=87 // pred_check_branch
          %2175 = sbr.rel (%p2173) target = $region112
        $region111: #{tpu_custom_call.1} parent=87 // pred_region
          %2177 = vsyncadd [#allocation5], 0
          %s2178 = sshll.u32 [#allocation9], 4
          %s2179 = int_to_ptr.vmem [resolvable:$true] %s2178
          %s2180 = sshll.u32 %s17, 4
          %s2181 = int_to_ptr.hbm [resolvable:$true] %s2180
          %2186 = dma.vmem_to_hbm [thread:$0]  %s2179, 256, %s2181, [#allocation5], 128, 128, 8
        $region112: #{tpu_custom_call.1} parent=87 // pred_fallthru
          _
        // Predicated region
        $region113: #{tpu_custom_call.1} parent=87 // pred_check
          %p2187 = pneg %p442
        $region114: #{tpu_custom_call.1} parent=87 // pred_check_branch
          %2189 = sbr.rel (%p2187) target = $region116
        $region115: #{tpu_custom_call.1} parent=87 // pred_region
          %2191 = vsyncadd [#allocation11], 0
          %s2192 = sshll.u32 [#allocation10], 4
          %s2193 = int_to_ptr.vmem [resolvable:$true] %s2192
          %s2194 = sshll.u32 %s18, 4
          %s2195 = int_to_ptr.hbm [resolvable:$true] %s2194
          %2200 = dma.vmem_to_hbm [thread:$0]  %s2193, 256, %s2195, [#allocation11], 128, 128, 8
        $region116: #{tpu_custom_call.1} parent=87 // pred_fallthru
          _
        // Predicated region
        $region117: #{tpu_custom_call.1} parent=87 // pred_check
          %p2201 = pneg %p421
        $region118: #{tpu_custom_call.1} parent=87 // pred_check_branch
          %2203 = sbr.rel (%p2201) target = $region120
        $region119: #{tpu_custom_call.1} parent=87 // pred_region
          %2205 = dma.done [#allocation5], 256
        $region120: #{tpu_custom_call.1} parent=87 // pred_fallthru
          _
        // Predicated region
        $region121: #{tpu_custom_call.1} parent=87 // pred_check
          %p2206 = pneg %p442
        $region122: #{tpu_custom_call.1} parent=87 // pred_check_branch
          %2208 = sbr.rel (%p2206) target = $region124
        $region123: #{tpu_custom_call.1} parent=87 // pred_region
          %2210 = dma.done [#allocation11], 256
        $region124: #{tpu_custom_call.1} parent=87 // pred_fallthru
          _
      $region88: #{tpu_custom_call.1} parent=5 // pred_fallthru
        _
      %p2211 = scmp.le.s32.totalorder 2, %s31
      // Predicated region
      $region125: #{tpu_custom_call.1} parent=5 // pred_check
        %p2212 = pneg %p2211
      $region126: #{tpu_custom_call.1} parent=5 // pred_check_branch
        %2214 = sbr.rel (%p2212) target = $region128
      $region127: #{tpu_custom_call.1} parent=5 // pred_region
        %s2215 = ssub.s32 %s31, 2
      $region128: #{tpu_custom_call.1} parent=5 // pred_fallthru
        _
    $region6: #{tpu_custom_call.1} parent=1 // loop_footer
      %s35 = sadd.s32 1, %s31
    $region7: #{tpu_custom_call.1} parent=1 // loop_footer_branch
      %30 = sbr.rel target = $region3
    $region8: #{tpu_custom_call.1} parent=1 // loop_exit
      _
    %2216 = vsyncpa [#allocation4], 1
    %s2217 = scalar_lea.sflag [#allocation4], 1
    %2218 = vsyncpa %s2217, 1
    %2219 = vsyncpa [#allocation7], 1
    %2220 = vsyncpa [#allocation5], 1
    %s2221 = scalar_lea.sflag [#allocation5], 1
    %2222 = vsyncpa %s2221, 1
    %2223 = vsyncpa [#allocation11], 1

</llo_original>
